<compile_context>
chip_gen: v7x
topology: tpu7x:2x2x1
jax: 0.10.0
libtpu: 0.0.40
codegen_flags: <defaults>
</compile_context>

<pallas_src>
import functools

import jax
import jax.numpy as jnp
from jax.experimental import pallas as pl
from jax.experimental.pallas import tpu as pltpu


# ----------------------------- Pallas kernel --------------------------------
def _inception_aux_kernel(xp_ref,       # (16*Npad, win*C) bf16, rows=(n, s), cols=(window pos, c)
                          wpc_ref,      # (win*C, 128)     bf16, pool + BN-scale folded conv weight
                          shift_ref,    # (1, 128)         f32 folded BN shift
                          wfc1q_ref,    # (2048, Ht)       int8 fc1 weight tile, rows = s*128 + k
                          wscale_ref,   # (1, Ht)          f32 per-output-column dequant scale
                          bfc1_ref,     # (1, Ht)          f32 fc1 bias tile
                          wfc2t_ref,    # (Ht, NCpad)      bf16 fc2 weight tile
                          out_ref):     # (1, Npad, NCpad) f32 partial logits for this hidden tile
    npad = out_ref.shape[1]

    # Fused pool + 1x1 conv (pool & BN scale folded into wpc), BN shift + ReLU.
    conv = jnp.dot(xp_ref[...], wpc_ref[...],
                   preferred_element_type=jnp.float32)           # (16*Npad, 128)
    h = jnp.maximum(conv + shift_ref[...], 0.0)                  # (16*Npad, 128)

    # Rows are (n, s)-ordered, so a single reshape gives the PyTorch-flatten
    # compatible (Npad, 16*128) slab with columns ordered s*128 + k.
    hf = h.reshape(npad, -1).astype(jnp.bfloat16)                # (Npad, 2048)

    # fc1 tile: int8 weights dequantized to bf16 (exact), f32 MXU accumulation,
    # per-column scale applied after the contraction, then bias + ReLU.
    w1 = wfc1q_ref[...].astype(jnp.bfloat16)                     # (2048, Ht)
    fc1 = jnp.dot(hf, w1, preferred_element_type=jnp.float32)    # (Npad, Ht)
    fc1 = jnp.maximum(fc1 * wscale_ref[...] + bfc1_ref[...], 0.0)

    # TODO(synk): Dropout(p=0.7) is eval-mode identity (no PRNG mask applied).

    # Partial fc2 logits for this hidden tile (f32 activations, bias added
    # once in the wrapper after summing the partial slabs).
    out_ref[0] = jnp.dot(fc1, wfc2t_ref[...].astype(jnp.float32),
                         preferred_element_type=jnp.float32)     # (Npad, NCpad)


# ------------------------------- wrappers -------------------------------------
def _rearrange_input(x, npad):
    """(N,C,H,W) -> (16*Npad, win*C) slab; rows=(n, s=bh*4+bw), cols=(window pos, c)."""
    n, c, hgt, wid = x.shape
    assert hgt % 4 == 0 and wid % 4 == 0, "adaptive pool assumed exact here"
    kh, kw = hgt // 4, wid // 4
    xr = x.reshape(n, c, 4, kh, 4, kw)           # (n, c, bh, ih, bw, iw)
    xr = xr.transpose(0, 2, 4, 3, 5, 1)          # (n, bh, bw, ih, iw, c)
    xp = xr.reshape(n * 16, kh * kw * c)
    if npad > n:                                 # zero-pad batch to a full sublane tile
        xp = jnp.pad(xp, ((0, 16 * (npad - n)), (0, 0)))
    return xp, kh * kw


def pack_params(params, *, num_classes, pool_window):
    """One-time weight fold/repack/quantize (run once, outside the per-call jit path)."""
    eps = 1e-5
    c = params["w_conv"].shape[1]
    scale = params["bn_gamma"] / jnp.sqrt(params["bn_var"] + eps)      # (128,)
    shift = params["bn_beta"] - params["bn_mean"] * scale              # (128,)
    w1t = params["w_conv"].reshape(128, c).T                           # (C, 128)
    # Fold average pool (1/win replicated over window positions) and BN scale.
    wpc = jnp.tile(w1t * scale[None, :], (pool_window, 1)) / float(pool_window)

    # fc1 weight (1024, 2048); PyTorch flatten feature f = k*16 + s -> rows s*128+k.
    wfc1 = params["w_fc1"].reshape(1024, 128, 16).transpose(2, 1, 0).reshape(2048, 1024)
    # int8 quantization with per-output-column scales (halves the dominant HBM stream).
    amax = jnp.max(jnp.abs(wfc1), axis=0)                              # (1024,)
    qscale = jnp.where(amax > 0, amax / 127.0, 1.0)
    wfc1_q = jnp.clip(jnp.round(wfc1 / qscale[None, :]), -127, 127).astype(jnp.int8)

    ncp = ((num_classes + 127) // 128) * 128                           # lane-dense pad
    wfc2t = jnp.zeros((1024, ncp), jnp.float32).at[:, :num_classes].set(
        params["w_fc2"].T)
    bfc2 = jnp.zeros((1, ncp), jnp.float32).at[:, :num_classes].set(
        params["b_fc2"][None, :])
    return {
        "wpc": wpc.astype(jnp.bfloat16),
        "shift": shift.reshape(1, 128).astype(jnp.float32),
        "wfc1_q": wfc1_q,                                              # (2048, 1024) int8
        "wfc1_scale": qscale.reshape(1, 1024).astype(jnp.float32),
        "bfc1": params["b_fc1"].reshape(1, 1024).astype(jnp.float32),
        "wfc2t": wfc2t.astype(jnp.bfloat16),
        "bfc2": bfc2.astype(jnp.float32),
    }


@functools.partial(jax.jit, static_argnames=("num_classes", "hidden_tile"))
def inception_aux_forward(x, packed, *, num_classes, hidden_tile=512):
    n = x.shape[0]
    npad = max(8, ((n + 7) // 8) * 8)             # sublane-aligned batch
    xp, _ = _rearrange_input(x, npad)             # (16*Npad, win*C)
    xp = xp.astype(jnp.bfloat16)

    kdim, hidden = packed["wfc1_q"].shape         # (2048, 1024)
    ncp = packed["wfc2t"].shape[1]
    assert hidden % hidden_tile == 0
    p_tiles = hidden // hidden_tile               # parallel hidden tiles (2 by default)

    partial = pl.pallas_call(
        _inception_aux_kernel,
        out_shape=jax.ShapeDtypeStruct((p_tiles, npad, ncp), jnp.float32),
        grid=(p_tiles,),
        in_specs=[
            pl.BlockSpec(xp.shape, lambda p: (0, 0)),                 # xp (resident)
            pl.BlockSpec(packed["wpc"].shape, lambda p: (0, 0)),      # folded conv w
            pl.BlockSpec((1, 128), lambda p: (0, 0)),                 # BN shift
            pl.BlockSpec((kdim, hidden_tile), lambda p: (0, p)),      # fc1 int8 weight tile
            pl.BlockSpec((1, hidden_tile), lambda p: (0, p)),         # fc1 dequant scale tile
            pl.BlockSpec((1, hidden_tile), lambda p: (0, p)),         # fc1 bias tile
            pl.BlockSpec((hidden_tile, ncp), lambda p: (p, 0)),       # fc2 weight tile
        ],
        out_specs=pl.BlockSpec((1, npad, ncp), lambda p: (p, 0, 0)),  # partial logits slab
        compiler_params=pltpu.CompilerParams(
            dimension_semantics=("parallel",)),   # independent hidden tiles (megacore on v7x)
    )(xp, packed["wpc"], packed["shift"], packed["wfc1_q"],
      packed["wfc1_scale"], packed["bfc1"], packed["wfc2t"])

    logits = jnp.sum(partial, axis=0) + packed["bfc2"]                # (Npad, NCpad)
    return logits[:n, :num_classes]


# --------------------------- reference (pure JAX) -----------------------------
def inception_aux_reference(x, params, num_classes):
    n, c, hgt, wid = x.shape
    eps = 1e-5
    pooled = x.reshape(n, c, 4, hgt // 4, 4, wid // 4).mean(axis=(3, 5))  # (N,C,4,4)
    w_conv = params["w_conv"].reshape(128, c)
    conv = jnp.einsum("nchw,kc->nkhw", pooled, w_conv, precision="highest")
    scale = params["bn_gamma"] / jnp.sqrt(params["bn_var"] + eps)
    shift = params["bn_beta"] - params["bn_mean"] * scale
    h = jnp.maximum(conv * scale[None, :, None, None] + shift[None, :, None, None], 0.0)
    flat = h.reshape(n, -1)                                                # (N, 2048)
    fc1 = jnp.maximum(
        jnp.dot(flat, params["w_fc1"].T, precision="highest") + params["b_fc1"], 0.0)
    out = jnp.dot(fc1, params["w_fc2"].T, precision="highest") + params["b_fc2"]
    return out


# ---------------------------------- main --------------------------------------
if __name__ == "__main__":
    N, C, H, W = 2, 4, 16, 16
    NUM_CLASSES = 8

    key = jax.random.PRNGKey(0)
    keys = jax.random.split(key, 10)

    x = jax.random.normal(keys[0], (N, C, H, W), jnp.float32)

    params = {
        "w_conv": jax.random.normal(keys[1], (128, C, 1, 1), jnp.float32) * 0.1,
        "bn_gamma": jax.random.uniform(keys[2], (128,), jnp.float32, 0.5, 1.5),
        "bn_beta": jax.random.normal(keys[3], (128,), jnp.float32) * 0.1,
        "bn_mean": jax.random.normal(keys[4], (128,), jnp.float32) * 0.1,
        "bn_var": jax.random.uniform(keys[5], (128,), jnp.float32, 0.5, 1.5),
        "w_fc1": jax.random.normal(keys[6], (1024, 128 * 4 * 4), jnp.float32) * 0.02,
        "b_fc1": jax.random.normal(keys[7], (1024,), jnp.float32) * 0.02,
        "w_fc2": jax.random.normal(keys[8], (NUM_CLASSES, 1024), jnp.float32) * 0.02,
        "b_fc2": jax.random.normal(keys[9], (NUM_CLASSES,), jnp.float32) * 0.02,
    }

    # One-time weight fold/repack/quantize (outside the per-call forward).
    packed = pack_params(params, num_classes=NUM_CLASSES,
                         pool_window=(H // 4) * (W // 4))

    out = inception_aux_forward(x, packed, num_classes=NUM_CLASSES, hidden_tile=512)
    out = jax.block_until_ready(out)

    ref = inception_aux_reference(x, params, NUM_CLASSES)
    assert out.shape == (N, NUM_CLASSES)
    assert jnp.allclose(out, ref, rtol=5e-2, atol=1e-2), (
        f"mismatch: max abs diff {jnp.max(jnp.abs(out - ref))}")

    print("KERNEL_OK")
</pallas_src>

<mosaic_0001>
module attributes {stable_mosaic.version = 11 : i64} {
  func.func @_inception_aux_kernel(%arg0: i32, %arg1: memref<128x64xbf16, #tpu.memory_space<vmem>>, %arg2: memref<64x128xbf16, #tpu.memory_space<vmem>>, %arg3: memref<1x128xf32, #tpu.memory_space<vmem>>, %arg4: memref<2048x512xi8, #tpu.memory_space<vmem>>, %arg5: memref<1x512xf32, #tpu.memory_space<vmem>>, %arg6: memref<1x512xf32, #tpu.memory_space<vmem>>, %arg7: memref<512x128xbf16, #tpu.memory_space<vmem>>, %arg8: memref<1x8x128xf32, #tpu.memory_space<vmem>>) attributes {dimension_semantics = [#tpu.dimension_semantics<parallel>], iteration_bounds = array<i64: 2>, scalar_prefetch = 0 : i64, scratch_operands = 0 : i64, tpu.core_type = #tpu.core_type<tc>, window_params = [{pipeline_mode = #tpu.pipeline_mode<synchronous>, transform_indices = @transform_0, window_bounds = array<i64: 128, 64>}, {pipeline_mode = #tpu.pipeline_mode<synchronous>, transform_indices = @transform_1, window_bounds = array<i64: 64, 128>}, {pipeline_mode = #tpu.pipeline_mode<synchronous>, transform_indices = @transform_2, window_bounds = array<i64: 1, 128>}, {transform_indices = @transform_3, window_bounds = array<i64: 2048, 512>}, {transform_indices = @transform_4, window_bounds = array<i64: 1, 512>}, {transform_indices = @transform_5, window_bounds = array<i64: 1, 512>}, {transform_indices = @transform_6, window_bounds = array<i64: 512, 128>}, {transform_indices = @transform_7, window_bounds = array<i64: 1, 8, 128>}]} {
    %c0 = arith.constant 0 : index
    %c0_0 = arith.constant 0 : index
    %0 = vector.load %arg1[%c0, %c0_0] : memref<128x64xbf16, #tpu.memory_space<vmem>>, vector<128x64xbf16>
    %c0_1 = arith.constant 0 : index
    %c0_2 = arith.constant 0 : index
    %1 = vector.load %arg2[%c0_1, %c0_2] : memref<64x128xbf16, #tpu.memory_space<vmem>>, vector<64x128xbf16>
    %cst = arith.constant dense<0.000000e+00> : vector<128x128xf32>
    %2 = tpu.matmul %0, %1, %cst {dimension_numbers = #tpu.dot_dimension_numbers<[1], [0], [0], [1], [0, 0, 1, 1], [], []>} : vector<128x64xbf16>, vector<64x128xbf16>, vector<128x128xf32> -> vector<128x128xf32>
    %c0_3 = arith.constant 0 : index
    %c0_4 = arith.constant 0 : index
    %3 = vector.load %arg3[%c0_3, %c0_4] : memref<1x128xf32, #tpu.memory_space<vmem>>, vector<1x128xf32>
    %4 = vector.broadcast %3 : vector<1x128xf32> to vector<128x128xf32>
    %5 = arith.addf %2, %4 : vector<128x128xf32>
    %cst_5 = arith.constant 0.000000e+00 : f32
    %6 = vector.broadcast %cst_5 : f32 to vector<128x128xf32>
    %7 = arith.maximumf %5, %6 : vector<128x128xf32>
    %8 = vector.shape_cast %7 : vector<128x128xf32> to vector<8x2048xf32>
    %9 = arith.truncf %8 : vector<8x2048xf32> to vector<8x2048xbf16>
    %c0_6 = arith.constant 0 : index
    %c0_7 = arith.constant 0 : index
    %10 = vector.load %arg4[%c0_6, %c0_7] : memref<2048x512xi8, #tpu.memory_space<vmem>>, vector<2048x512xi8>
    %11 = arith.sitofp %10 : vector<2048x512xi8> to vector<2048x512xbf16>
    %cst_8 = arith.constant dense<0.000000e+00> : vector<8x512xf32>
    %12 = tpu.matmul %9, %11, %cst_8 {dimension_numbers = #tpu.dot_dimension_numbers<[1], [0], [0], [1], [0, 0, 1, 1], [], []>} : vector<8x2048xbf16>, vector<2048x512xbf16>, vector<8x512xf32> -> vector<8x512xf32>
    %c0_9 = arith.constant 0 : index
    %c0_10 = arith.constant 0 : index
    %13 = vector.load %arg5[%c0_9, %c0_10] : memref<1x512xf32, #tpu.memory_space<vmem>>, vector<1x512xf32>
    %14 = vector.broadcast %13 : vector<1x512xf32> to vector<8x512xf32>
    %15 = arith.mulf %12, %14 : vector<8x512xf32>
    %c0_11 = arith.constant 0 : index
    %c0_12 = arith.constant 0 : index
    %16 = vector.load %arg6[%c0_11, %c0_12] : memref<1x512xf32, #tpu.memory_space<vmem>>, vector<1x512xf32>
    %17 = vector.broadcast %16 : vector<1x512xf32> to vector<8x512xf32>
    %18 = arith.addf %15, %17 : vector<8x512xf32>
    %cst_13 = arith.constant 0.000000e+00 : f32
    %19 = vector.broadcast %cst_13 : f32 to vector<8x512xf32>
    %20 = arith.maximumf %18, %19 : vector<8x512xf32>
    %c0_14 = arith.constant 0 : index
    %c0_15 = arith.constant 0 : index
    %21 = vector.load %arg7[%c0_14, %c0_15] : memref<512x128xbf16, #tpu.memory_space<vmem>>, vector<512x128xbf16>
    %22 = arith.extf %21 : vector<512x128xbf16> to vector<512x128xf32>
    %cst_16 = arith.constant dense<0.000000e+00> : vector<8x128xf32>
    %23 = tpu.matmul %20, %22, %cst_16 {dimension_numbers = #tpu.dot_dimension_numbers<[1], [0], [0], [1], [0, 0, 1, 1], [], []>} : vector<8x512xf32>, vector<512x128xf32>, vector<8x128xf32> -> vector<8x128xf32>
    %c0_17 = arith.constant 0 : index
    %c0_18 = arith.constant 0 : index
    %c0_19 = arith.constant 0 : index
    %24 = vector.load %arg8[%c0_17, %c0_18, %c0_19] : memref<1x8x128xf32, #tpu.memory_space<vmem>>, vector<1x8x128xf32>
    %25 = vector.shape_cast %24 : vector<1x8x128xf32> to vector<8x128xf32>
    %26 = vector.shape_cast %23 : vector<8x128xf32> to vector<1x8x128xf32>
    tpu.vector_store %arg8[%c0_17, %c0_18, %c0_19], %26 {strides = array<i32>} : memref<1x8x128xf32, #tpu.memory_space<vmem>>, vector<1x8x128xf32>,
    return
  }
  func.func @transform_0(%arg0: i32) -> (i32, i32) {
    %c0_i32 = arith.constant 0 : i32
    %c0_i32_0 = arith.constant 0 : i32
    %c0_i32_1 = arith.constant 0 : i32
    return %c0_i32, %c0_i32_0 : i32, i32
  }
  func.func @transform_1(%arg0: i32) -> (i32, i32) {
    %c0_i32 = arith.constant 0 : i32
    %c0_i32_0 = arith.constant 0 : i32
    %c0_i32_1 = arith.constant 0 : i32
    return %c0_i32, %c0_i32_0 : i32, i32
  }
  func.func @transform_2(%arg0: i32) -> (i32, i32) {
    %c0_i32 = arith.constant 0 : i32
    %c0_i32_0 = arith.constant 0 : i32
    %c0_i32_1 = arith.constant 0 : i32
    return %c0_i32, %c0_i32_0 : i32, i32
  }
  func.func @transform_3(%arg0: i32) -> (i32, i32) {
    %c0_i32 = arith.constant 0 : i32
    %c0_i32_0 = arith.constant 0 : i32
    return %c0_i32, %arg0 : i32, i32
  }
  func.func @transform_4(%arg0: i32) -> (i32, i32) {
    %c0_i32 = arith.constant 0 : i32
    %c0_i32_0 = arith.constant 0 : i32
    return %c0_i32, %arg0 : i32, i32
  }
  func.func @transform_5(%arg0: i32) -> (i32, i32) {
    %c0_i32 = arith.constant 0 : i32
    %c0_i32_0 = arith.constant 0 : i32
    return %c0_i32, %arg0 : i32, i32
  }
  func.func @transform_6(%arg0: i32) -> (i32, i32) {
    %c0_i32 = arith.constant 0 : i32
    %c0_i32_0 = arith.constant 0 : i32
    return %arg0, %c0_i32 : i32, i32
  }
  func.func @transform_7(%arg0: i32) -> (i32, i32, i32) {
    %c0_i32 = arith.constant 0 : i32
    %c0_i32_0 = arith.constant 0 : i32
    %c0_i32_1 = arith.constant 0 : i32
    return %arg0, %c0_i32, %c0_i32_0 : i32, i32, i32
  }
}

</mosaic_0001>

<llo_original>
// kernel: inception_aux_forward.1
$region0: #{inception_aux_forward.1}
  #allocation0 [shape = 'u32[]', space=smem, size = 0x4, offset = 0x4, fixed_abs, tag = 'smem constant byte address 0x4 - core index']
  #allocation1 [shape = 'u32[144,128]{1,0:T(1,128)}', space=vmem, size = 0x12000, scoped, tag = 'internal scratch']
  %s0 = inlined_call_operand.vmem [shape: bf16[128,64], index: 0, kind: input, shape index: {}]
  %s1 = inlined_call_operand.hbm [shape: bf16[64,128], index: 1, kind: input, shape index: {}]
  %s2 = inlined_call_operand.hbm [shape: f32[1,128], index: 2, kind: input, shape index: {}]
  %s3 = inlined_call_operand.hbm [shape: s8[2048,1024], index: 3, kind: input, shape index: {}]
  %s4 = inlined_call_operand.hbm [shape: f32[1,1024], index: 4, kind: input, shape index: {}]
  %s5 = inlined_call_operand.hbm [shape: f32[1,1024], index: 5, kind: input, shape index: {}]
  %s6 = inlined_call_operand.hbm [shape: bf16[1024,128], index: 6, kind: input, shape index: {}]
  %s7 = inlined_call_operand.vmem [shape: f32[2,8,128], index: 7, kind: output, shape index: {}]
  %s8 = sld [smem:[#allocation0]]
  $region85: #{inception_aux_forward.1} parent=0
    _
  %s10 = ssub.s32 1, %s8
  %s11 = scalar_select 0, %s10, %s8
  $region1: #{inception_aux_forward.1} parent=0
    #allocation2 [shape = 'u8[16384]{0}', space=vmem, size = 0x4000, scoped, tag = 'input window, operand 1, single buffered']
    #allocation3 [shape = 's32[2]{0}', space=sflag, size = 0x8, scoped, tag = 'scoped memory for inception_aux_forward.1']
    #allocation4 [shape = 'u8[512]{0}', space=vmem, size = 0x400, scoped, tag = 'input window, operand 2, single buffered']
    #allocation5 [shape = 's32[1]{0}', space=sflag, size = 0x4, scoped, tag = 'scoped memory for inception_aux_forward.1']
    #allocation6 [shape = 'u8[2097152]{0}', space=vmem, size = 0x200000, scoped, tag = 'input window, operand 3']
    #allocation7 [shape = 'u8[4096]{0}', space=vmem, size = 0x1000, scoped, tag = 'input window, operand 4']
    #allocation8 [shape = 'u8[4096]{0}', space=vmem, size = 0x1000, scoped, tag = 'input window, operand 5']
    #allocation9 [shape = 'u8[262144]{0}', space=vmem, size = 0x40000, scoped, tag = 'input window, operand 6']
    %12 = vsyncpa [#allocation3], 0
    %13 = vsyncpa [#allocation5], 0
    loop: start=0, step=1, limit=4
    $region2: #{inception_aux_forward.1} parent=1 // loop_pre_header
      _
    $region3: #{inception_aux_forward.1} parent=1 // loop_header
      %s15 = sphi 0, %s19
      %p16 = scmp.ge.s32.totalorder %s15, 4
      %s23 = sphi 0, %s23
      %s25 = sphi 0, %s23
      %s26 = sphi 0, %s25
      %s40 = sphi 0, %s26
      %s44 = sphi 0, %s44
      %s46 = sphi 0, %s44
      %s47 = sphi 0, %s46
      %s61 = sphi 0, %s47
      %s65 = sphi 0, %s65
      %s67 = sphi 0, %s65
      %s68 = sphi 0, %s67
      %s82 = sphi 0, %s68
      %s88 = sphi 0, %s90
      %s91 = sphi 0, %s88
      %s92 = sphi 0, %s91
      %s108 = sphi 0, %s92
      %s114 = sphi 0, %s116
      %s117 = sphi 0, %s114
      %s118 = sphi 0, %s117
      %s134 = sphi 0, %s118
      %s140 = sphi 0, %s142
      %s143 = sphi 0, %s140
      %s144 = sphi 0, %s143
      %s160 = sphi 0, %s144
      %s166 = sphi 0, %s168
      %s169 = sphi 0, %s166
      %s170 = sphi 0, %s169
      %s186 = sphi 0, %s170
      %s192 = sphi 0, %s194
      %s195 = sphi 0, %s192
      %s196 = sphi 0, %s195
      %s212 = sphi 0, %s196
    $region4: #{inception_aux_forward.1} parent=1 // loop_header_branch
      %18 = sbr.rel (%p16) target = $region8
    $region5: #{inception_aux_forward.1} parent=1 // loop_body
      %s20 = ssub.s32 %s15, 1
      %s21 = ssub.s32 %s15, 2
      %s22 = sadd.s32 %s15, 1
      %s24 = sadd.s32 %s23, 1
      %p27 = scmp.eq.s32.totalorder %s15, 1
      %p28 = scmp.ne.s32.totalorder %s23, %s25
      %p29 = scmp.eq.s32.totalorder %s15, 0
      %p30 = por %p28, %p29
      %p31 = scmp.ne.s32.totalorder %s23, %s25
      %p32 = scmp.eq.s32.totalorder %s20, 1
      %p33 = por %p31, %p32
      %p34 = scmp.ne.s32.totalorder %s25, %s26
      %p35 = scmp.eq.s32.totalorder %s20, 0
      %p36 = por %p34, %p35
      %p37 = scmp.ne.s32.totalorder %s25, %s26
      %p38 = scmp.eq.s32.totalorder %s21, 1
      %p39 = por %p37, %p38
      %p41 = scmp.ne.s32.totalorder %s26, %s40
      %p42 = scmp.eq.s32.totalorder %s21, 0
      %p43 = por %p41, %p42
      %s45 = sadd.s32 %s44, 1
      %p48 = scmp.eq.s32.totalorder %s15, 1
      %p49 = scmp.ne.s32.totalorder %s44, %s46
      %p50 = scmp.eq.s32.totalorder %s15, 0
      %p51 = por %p49, %p50
      %p52 = scmp.ne.s32.totalorder %s44, %s46
      %p53 = scmp.eq.s32.totalorder %s20, 1
      %p54 = por %p52, %p53
      %p55 = scmp.ne.s32.totalorder %s46, %s47
      %p56 = scmp.eq.s32.totalorder %s20, 0
      %p57 = por %p55, %p56
      %p58 = scmp.ne.s32.totalorder %s46, %s47
      %p59 = scmp.eq.s32.totalorder %s21, 1
      %p60 = por %p58, %p59
      %p62 = scmp.ne.s32.totalorder %s47, %s61
      %p63 = scmp.eq.s32.totalorder %s21, 0
      %p64 = por %p62, %p63
      %s66 = sadd.s32 %s65, 1
      %p69 = scmp.eq.s32.totalorder %s15, 1
      %p70 = scmp.ne.s32.totalorder %s65, %s67
      %p71 = scmp.eq.s32.totalorder %s15, 0
      %p72 = por %p70, %p71
      %p73 = scmp.ne.s32.totalorder %s65, %s67
      %p74 = scmp.eq.s32.totalorder %s20, 1
      %p75 = por %p73, %p74
      %p76 = scmp.ne.s32.totalorder %s67, %s68
      %p77 = scmp.eq.s32.totalorder %s20, 0
      %p78 = por %p76, %p77
      %p79 = scmp.ne.s32.totalorder %s67, %s68
      %p80 = scmp.eq.s32.totalorder %s21, 1
      %p81 = por %p79, %p80
      %p83 = scmp.ne.s32.totalorder %s68, %s82
      %p84 = scmp.eq.s32.totalorder %s21, 0
      %p85 = por %p83, %p84
      %s86 = ssub.s32 %s15, %s22
      %p87 = scmp.eq.s32.totalorder %s86, 0
      %s89 = sadd.s32 %s88, 1
      %s90 = scalar_select %p87, %s88, %s89
      %p93 = pneg %p87
      %p94 = scmp.eq.s32.totalorder %s15, 1
      %p95 = por %p93, %p94
      %p96 = scmp.ne.s32.totalorder %s88, %s91
      %p97 = scmp.eq.s32.totalorder %s15, 0
      %p98 = por %p96, %p97
      %p99 = scmp.ne.s32.totalorder %s88, %s91
      %p100 = scmp.eq.s32.totalorder %s20, 1
      %p101 = por %p99, %p100
      %p102 = scmp.ne.s32.totalorder %s91, %s92
      %p103 = scmp.eq.s32.totalorder %s20, 0
      %p104 = por %p102, %p103
      %p105 = scmp.ne.s32.totalorder %s91, %s92
      %p106 = scmp.eq.s32.totalorder %s21, 1
      %p107 = por %p105, %p106
      %p109 = scmp.ne.s32.totalorder %s92, %s108
      %p110 = scmp.eq.s32.totalorder %s21, 0
      %p111 = por %p109, %p110
      %s112 = ssub.s32 %s15, %s22
      %p113 = scmp.eq.s32.totalorder %s112, 0
      %s115 = sadd.s32 %s114, 1
      %s116 = scalar_select %p113, %s114, %s115
      %p119 = pneg %p113
      %p120 = scmp.eq.s32.totalorder %s15, 1
      %p121 = por %p119, %p120
      %p122 = scmp.ne.s32.totalorder %s114, %s117
      %p123 = scmp.eq.s32.totalorder %s15, 0
      %p124 = por %p122, %p123
      %p125 = scmp.ne.s32.totalorder %s114, %s117
      %p126 = scmp.eq.s32.totalorder %s20, 1
      %p127 = por %p125, %p126
      %p128 = scmp.ne.s32.totalorder %s117, %s118
      %p129 = scmp.eq.s32.totalorder %s20, 0
      %p130 = por %p128, %p129
      %p131 = scmp.ne.s32.totalorder %s117, %s118
      %p132 = scmp.eq.s32.totalorder %s21, 1
      %p133 = por %p131, %p132
      %p135 = scmp.ne.s32.totalorder %s118, %s134
      %p136 = scmp.eq.s32.totalorder %s21, 0
      %p137 = por %p135, %p136
      %s138 = ssub.s32 %s15, %s22
      %p139 = scmp.eq.s32.totalorder %s138, 0
      %s141 = sadd.s32 %s140, 1
      %s142 = scalar_select %p139, %s140, %s141
      %p145 = pneg %p139
      %p146 = scmp.eq.s32.totalorder %s15, 1
      %p147 = por %p145, %p146
      %p148 = scmp.ne.s32.totalorder %s140, %s143
      %p149 = scmp.eq.s32.totalorder %s15, 0
      %p150 = por %p148, %p149
      %p151 = scmp.ne.s32.totalorder %s140, %s143
      %p152 = scmp.eq.s32.totalorder %s20, 1
      %p153 = por %p151, %p152
      %p154 = scmp.ne.s32.totalorder %s143, %s144
      %p155 = scmp.eq.s32.totalorder %s20, 0
      %p156 = por %p154, %p155
      %p157 = scmp.ne.s32.totalorder %s143, %s144
      %p158 = scmp.eq.s32.totalorder %s21, 1
      %p159 = por %p157, %p158
      %p161 = scmp.ne.s32.totalorder %s144, %s160
      %p162 = scmp.eq.s32.totalorder %s21, 0
      %p163 = por %p161, %p162
      %s164 = ssub.s32 %s15, %s22
      %p165 = scmp.eq.s32.totalorder %s164, 0
      %s167 = sadd.s32 %s166, 1
      %s168 = scalar_select %p165, %s166, %s167
      %p171 = pneg %p165
      %p172 = scmp.eq.s32.totalorder %s15, 1
      %p173 = por %p171, %p172
      %p174 = scmp.ne.s32.totalorder %s166, %s169
      %p175 = scmp.eq.s32.totalorder %s15, 0
      %p176 = por %p174, %p175
      %p177 = scmp.ne.s32.totalorder %s166, %s169
      %p178 = scmp.eq.s32.totalorder %s20, 1
      %p179 = por %p177, %p178
      %p180 = scmp.ne.s32.totalorder %s169, %s170
      %p181 = scmp.eq.s32.totalorder %s20, 0
      %p182 = por %p180, %p181
      %p183 = scmp.ne.s32.totalorder %s169, %s170
      %p184 = scmp.eq.s32.totalorder %s21, 1
      %p185 = por %p183, %p184
      %p187 = scmp.ne.s32.totalorder %s170, %s186
      %p188 = scmp.eq.s32.totalorder %s21, 0
      %p189 = por %p187, %p188
      %s190 = ssub.s32 %s15, %s22
      %p191 = scmp.eq.s32.totalorder %s190, 0
      %s193 = sadd.s32 %s192, 1
      %s194 = scalar_select %p191, %s192, %s193
      %p197 = pneg %p191
      %p198 = scmp.eq.s32.totalorder %s15, 1
      %p199 = por %p197, %p198
      %p200 = scmp.ne.s32.totalorder %s192, %s195
      %p201 = scmp.eq.s32.totalorder %s15, 0
      %p202 = por %p200, %p201
      %p203 = scmp.ne.s32.totalorder %s192, %s195
      %p204 = scmp.eq.s32.totalorder %s20, 1
      %p205 = por %p203, %p204
      %p206 = scmp.ne.s32.totalorder %s195, %s196
      %p207 = scmp.eq.s32.totalorder %s20, 0
      %p208 = por %p206, %p207
      %p209 = scmp.ne.s32.totalorder %s195, %s196
      %p210 = scmp.eq.s32.totalorder %s21, 1
      %p211 = por %p209, %p210
      %p213 = scmp.ne.s32.totalorder %s196, %s212
      %p214 = scmp.eq.s32.totalorder %s21, 0
      %p215 = por %p213, %p214
      %p216 = scmp.le.s32.totalorder 1, %s15
      %p217 = scmp.lt.s32.totalorder %s15, 3
      %p218 = pnand %p216, %p217
      %p219 = pneg %p218
      // Predicated region
      $region9: #{inception_aux_forward.1} parent=5 // pred_check
        _
      $region10: #{inception_aux_forward.1} parent=5 // pred_check_branch
        %221 = sbr.rel (%p218) target = $region12
      $region11: #{inception_aux_forward.1} parent=5 // pred_region
        %s222 = ssub.s32 %s15, 1
        // Predicated region
        $region13: #{inception_aux_forward.1} parent=11 // pred_check
          %p223 = pneg %p36
        $region14: #{inception_aux_forward.1} parent=11 // pred_check_branch
          %225 = sbr.rel (%p223) target = $region16
        $region15: #{inception_aux_forward.1} parent=11 // pred_region
          _
        $region16: #{inception_aux_forward.1} parent=11 // pred_fallthru
          _
        // Predicated region
        $region17: #{inception_aux_forward.1} parent=11 // pred_check
          %p226 = pneg %p57
        $region18: #{inception_aux_forward.1} parent=11 // pred_check_branch
          %228 = sbr.rel (%p226) target = $region20
        $region19: #{inception_aux_forward.1} parent=11 // pred_region
          %s230 = ssub.s32 512, 512
          %231 = vsyncadd [#allocation3], %s230
          %s232 = sshll.u32 [#allocation2], 4
          %s233 = int_to_ptr.vmem [resolvable:$true] %s232
          %238 = dma.hbm_to_vmem [thread:$0]  %s1, 512, %s233, [#allocation3], 64, 64, 4
        $region20: #{inception_aux_forward.1} parent=11 // pred_fallthru
          _
        // Predicated region
        $region21: #{inception_aux_forward.1} parent=11 // pred_check
          %p239 = pneg %p78
        $region22: #{inception_aux_forward.1} parent=11 // pred_check_branch
          %241 = sbr.rel (%p239) target = $region24
        $region23: #{inception_aux_forward.1} parent=11 // pred_region
          %s243 = ssub.s32 16, 16
          %244 = vsyncadd [#allocation5], %s243
          %s246 = sshll.u32 [#allocation4], 4
          %s247 = int_to_ptr.vmem [resolvable:$true] %s246
          %249 = dma.hbm_to_vmem [thread:$0]  %s2, 16, %s247, [#allocation5]
        $region24: #{inception_aux_forward.1} parent=11 // pred_fallthru
          _
      $region12: #{inception_aux_forward.1} parent=5 // pred_fallthru
        _
      %p250 = scmp.lt.s32.totalorder %s15, 2
      // Predicated region
      $region25: #{inception_aux_forward.1} parent=5 // pred_check
        %p251 = pneg %p250
      $region26: #{inception_aux_forward.1} parent=5 // pred_check_branch
        %253 = sbr.rel (%p251) target = $region28
      $region27: #{inception_aux_forward.1} parent=5 // pred_region
        // Predicated region
        $region29: #{inception_aux_forward.1} parent=27 // pred_check
          %p254 = pneg %p98
        $region30: #{inception_aux_forward.1} parent=27 // pred_check_branch
          %256 = sbr.rel (%p254) target = $region32
        $region31: #{inception_aux_forward.1} parent=27 // pred_region
          %s257 = sand.u32 %s15, 1
          %s258 = scalar_lea.sflag [#allocation3], %s257
          %s259 = sand.u32 %s88, 1
          %s260 = smul.addr %s259, 2048
          %s261 = scalar_lea.vmem [#allocation6], %s260
          %s262 = smul.u32 4, %s15
          %s264 = ssub.s32 32768, 32768
          %265 = vsyncadd %s258, %s264
          %s266 = smul.addr %s262, 128
          %s267 = scalar_lea.hbm %s3, %s266
          %s268 = sshll.u32 %s261, 4
          %s269 = int_to_ptr.vmem [resolvable:$true] %s268
          %274 = dma.hbm_to_vmem [thread:$0]  %s267, 32768, %s269, %s258, 1024, 512, 32
        $region32: #{inception_aux_forward.1} parent=27 // pred_fallthru
          _
        // Predicated region
        $region33: #{inception_aux_forward.1} parent=27 // pred_check
          %p275 = pneg %p124
        $region34: #{inception_aux_forward.1} parent=27 // pred_check_branch
          %277 = sbr.rel (%p275) target = $region36
        $region35: #{inception_aux_forward.1} parent=27 // pred_region
          %s278 = sand.u32 %s15, 1
          %s279 = scalar_lea.sflag [#allocation3], %s278
          %s280 = sand.u32 %s114, 1
          %s281 = smul.addr %s280, 4
          %s282 = scalar_lea.vmem [#allocation7], %s281
          %s283 = smul.u32 4, %s15
          %s285 = ssub.s32 64, 64
          %286 = vsyncadd %s279, %s285
          %s287 = smul.addr %s283, 16
          %s288 = scalar_lea.hbm %s4, %s287
          %s290 = sshll.u32 %s282, 4
          %s291 = int_to_ptr.vmem [resolvable:$true] %s290
          %293 = dma.hbm_to_vmem [thread:$0]  %s288, 64, %s291, %s279
        $region36: #{inception_aux_forward.1} parent=27 // pred_fallthru
          _
        // Predicated region
        $region37: #{inception_aux_forward.1} parent=27 // pred_check
          %p294 = pneg %p150
        $region38: #{inception_aux_forward.1} parent=27 // pred_check_branch
          %296 = sbr.rel (%p294) target = $region40
        $region39: #{inception_aux_forward.1} parent=27 // pred_region
          %s297 = sand.u32 %s15, 1
          %s298 = scalar_lea.sflag [#allocation3], %s297
          %s299 = sand.u32 %s140, 1
          %s300 = smul.addr %s299, 4
          %s301 = scalar_lea.vmem [#allocation8], %s300
          %s302 = smul.u32 4, %s15
          %s304 = ssub.s32 64, 64
          %305 = vsyncadd %s298, %s304
          %s306 = smul.addr %s302, 16
          %s307 = scalar_lea.hbm %s5, %s306
          %s309 = sshll.u32 %s301, 4
          %s310 = int_to_ptr.vmem [resolvable:$true] %s309
          %312 = dma.hbm_to_vmem [thread:$0]  %s307, 64, %s310, %s298
        $region40: #{inception_aux_forward.1} parent=27 // pred_fallthru
          _
        // Predicated region
        $region41: #{inception_aux_forward.1} parent=27 // pred_check
          %p313 = pneg %p176
        $region42: #{inception_aux_forward.1} parent=27 // pred_check_branch
          %315 = sbr.rel (%p313) target = $region44
        $region43: #{inception_aux_forward.1} parent=27 // pred_region
          %s316 = sand.u32 %s15, 1
          %s317 = scalar_lea.sflag [#allocation3], %s316
          %s318 = sand.u32 %s166, 1
          %s319 = smul.addr %s318, 256
          %s320 = scalar_lea.vmem [#allocation9], %s319
          %s321 = smul.u32 64, %s15
          %s323 = ssub.s32 4096, 4096
          %324 = vsyncadd %s317, %s323
          %s325 = smul.addr %s321, 64
          %s326 = scalar_lea.hbm %s6, %s325
          %s327 = sshll.u32 %s320, 4
          %s328 = int_to_ptr.vmem [resolvable:$true] %s327
          %333 = dma.hbm_to_vmem [thread:$0]  %s326, 4096, %s328, %s317, 64, 64, 4
        $region44: #{inception_aux_forward.1} parent=27 // pred_fallthru
          _
      $region28: #{inception_aux_forward.1} parent=5 // pred_fallthru
        _
      %p334 = scmp.le.s32.totalorder 1, %s15
      %p335 = scmp.lt.s32.totalorder %s15, 3
      %p336 = pnand %p334, %p335
      %p337 = pneg %p336
      // Predicated region
      $region45: #{inception_aux_forward.1} parent=5 // pred_check
        _
      $region46: #{inception_aux_forward.1} parent=5 // pred_check_branch
        %339 = sbr.rel (%p336) target = $region48
      $region47: #{inception_aux_forward.1} parent=5 // pred_region
        %s340 = ssub.s32 %s15, 1
        // Predicated region
        $region49: #{inception_aux_forward.1} parent=47 // pred_check
          %p341 = pneg %p57
        $region50: #{inception_aux_forward.1} parent=47 // pred_check_branch
          %343 = sbr.rel (%p341) target = $region52
        $region51: #{inception_aux_forward.1} parent=47 // pred_region
          %344 = dma.done [#allocation3], 512
        $region52: #{inception_aux_forward.1} parent=47 // pred_fallthru
          _
        // Predicated region
        $region53: #{inception_aux_forward.1} parent=47 // pred_check
          %p345 = pneg %p78
        $region54: #{inception_aux_forward.1} parent=47 // pred_check_branch
          %347 = sbr.rel (%p345) target = $region56
        $region55: #{inception_aux_forward.1} parent=47 // pred_region
          %348 = dma.done [#allocation5], 16
        $region56: #{inception_aux_forward.1} parent=47 // pred_fallthru
          _
        %s349 = sand.u32 %s20, 1
        %s350 = scalar_lea.sflag [#allocation3], %s349
        %s351 = sand.u32 %s91, 1
        %s352 = smul.addr %s351, 2048
        %s353 = scalar_lea.vmem [#allocation6], %s352
        // Predicated region
        $region57: #{inception_aux_forward.1} parent=47 // pred_check
          %p354 = pneg %p104
        $region58: #{inception_aux_forward.1} parent=47 // pred_check_branch
          %356 = sbr.rel (%p354) target = $region60
        $region59: #{inception_aux_forward.1} parent=47 // pred_region
          %357 = dma.done %s350, 32768
        $region60: #{inception_aux_forward.1} parent=47 // pred_fallthru
          _
        %s358 = sand.u32 %s20, 1
        %s359 = scalar_lea.sflag [#allocation3], %s358
        %s360 = sand.u32 %s117, 1
        %s361 = smul.addr %s360, 4
        %s362 = scalar_lea.vmem [#allocation7], %s361
        // Predicated region
        $region61: #{inception_aux_forward.1} parent=47 // pred_check
          %p363 = pneg %p130
        $region62: #{inception_aux_forward.1} parent=47 // pred_check_branch
          %365 = sbr.rel (%p363) target = $region64
        $region63: #{inception_aux_forward.1} parent=47 // pred_region
          %366 = dma.done %s359, 64
        $region64: #{inception_aux_forward.1} parent=47 // pred_fallthru
          _
        %s367 = sand.u32 %s20, 1
        %s368 = scalar_lea.sflag [#allocation3], %s367
        %s369 = sand.u32 %s143, 1
        %s370 = smul.addr %s369, 4
        %s371 = scalar_lea.vmem [#allocation8], %s370
        // Predicated region
        $region65: #{inception_aux_forward.1} parent=47 // pred_check
          %p372 = pneg %p156
        $region66: #{inception_aux_forward.1} parent=47 // pred_check_branch
          %374 = sbr.rel (%p372) target = $region68
        $region67: #{inception_aux_forward.1} parent=47 // pred_region
          %375 = dma.done %s368, 64
        $region68: #{inception_aux_forward.1} parent=47 // pred_fallthru
          _
        %s376 = sand.u32 %s20, 1
        %s377 = scalar_lea.sflag [#allocation3], %s376
        %s378 = sand.u32 %s169, 1
        %s379 = smul.addr %s378, 256
        %s380 = scalar_lea.vmem [#allocation9], %s379
        // Predicated region
        $region69: #{inception_aux_forward.1} parent=47 // pred_check
          %p381 = pneg %p182
        $region70: #{inception_aux_forward.1} parent=47 // pred_check_branch
          %383 = sbr.rel (%p381) target = $region72
        $region71: #{inception_aux_forward.1} parent=47 // pred_region
          %384 = dma.done %s377, 4096
        $region72: #{inception_aux_forward.1} parent=47 // pred_fallthru
          _
        %p385 = pneg %p36
        %p386 = pneg %p33
        %p387 = pneg %p57
        %p388 = pneg %p54
        %p389 = pneg %p78
        %p390 = pneg %p75
        %s391 = sand.u32 %s20, 1
        %s392 = scalar_lea.sflag [#allocation3], %s391
        %s393 = sand.u32 %s91, 1
        %s394 = smul.addr %s393, 2048
        %s395 = scalar_lea.vmem [#allocation6], %s394
        %p396 = pneg %p104
        %p397 = pneg %p101
        %s398 = sand.u32 %s20, 1
        %s399 = scalar_lea.sflag [#allocation3], %s398
        %s400 = sand.u32 %s117, 1
        %s401 = smul.addr %s400, 4
        %s402 = scalar_lea.vmem [#allocation7], %s401
        %p403 = pneg %p130
        %p404 = pneg %p127
        %s405 = sand.u32 %s20, 1
        %s406 = scalar_lea.sflag [#allocation3], %s405
        %s407 = sand.u32 %s143, 1
        %s408 = smul.addr %s407, 4
        %s409 = scalar_lea.vmem [#allocation8], %s408
        %p410 = pneg %p156
        %p411 = pneg %p153
        %s412 = sand.u32 %s20, 1
        %s413 = scalar_lea.sflag [#allocation3], %s412
        %s414 = sand.u32 %s169, 1
        %s415 = smul.addr %s414, 256
        %s416 = scalar_lea.vmem [#allocation9], %s415
        %p417 = pneg %p182
        %p418 = pneg %p179
        %p419 = pneg %p208
        %p420 = pneg %p205
        %p421 = scmp.lt.s32.totalorder %s20, 1
        %s422 = scalar_select %p421, %s20, 1
        %s423 = smul.addr %s422, 8
        %s424 = scalar_lea.vmem %s7, %s423
        %s425 = smul.u32 4, %s20
        %s426 = smul.u32 4, %s20
        %s427 = smul.u32 4, %s20
        %s428 = smul.u32 64, %s20
        %p429 = scmp.lt.s32.totalorder %s20, 1
        %s430 = scalar_select %p429, %s20, 1
        %s431 = smul.addr %s430, 8
        %s432 = scalar_lea.vmem %s7, %s431
        %v434 = vld [vmem:[%s0] sm:$0xf]
        %v435 = vld [vmem:[%s0 + $0x4] sm:$0xf]
        %v436 = vld [vmem:[%s0 + $0x8] sm:$0xf]
        %v437 = vld [vmem:[%s0 + $0xc] sm:$0xf]
        %v438 = vld [vmem:[%s0 + $0x10] sm:$0xf]
        %v439 = vld [vmem:[%s0 + $0x14] sm:$0xf]
        %v440 = vld [vmem:[%s0 + $0x18] sm:$0xf]
        %v441 = vld [vmem:[%s0 + $0x1c] sm:$0xf]
        %v442 = vld [vmem:[%s0 + $0x20] sm:$0xf]
        %v443 = vld [vmem:[%s0 + $0x24] sm:$0xf]
        %v444 = vld [vmem:[%s0 + $0x28] sm:$0xf]
        %v445 = vld [vmem:[%s0 + $0x2c] sm:$0xf]
        %v446 = vld [vmem:[%s0 + $0x30] sm:$0xf]
        %v447 = vld [vmem:[%s0 + $0x34] sm:$0xf]
        %v448 = vld [vmem:[%s0 + $0x38] sm:$0xf]
        %v449 = vld [vmem:[%s0 + $0x3c] sm:$0xf]
        %v450 = vld [vmem:[#allocation2] sm:$0xf]
        %v451 = vld [vmem:[#allocation2 + $0x4] sm:$0xf]
        %v452 = vld [vmem:[#allocation2 + $0x8] sm:$0xf]
        %v453 = vld [vmem:[#allocation2 + $0xc] sm:$0xf]
        %v454 = vld [vmem:[#allocation2 + $0x10] sm:$0xf]
        %v455 = vld [vmem:[#allocation2 + $0x14] sm:$0xf]
        %v456 = vld [vmem:[#allocation2 + $0x18] sm:$0xf]
        %v457 = vld [vmem:[#allocation2 + $0x1c] sm:$0xf]
        %v458 = vld [vmem:[#allocation4] sm:$0x1]
        %v460 = vlaneseq
        %v461 = vshrl.u32 %v460, 7
        %v462 = vsub.s32 0, %v461
        %v463 = vrot.slane %v458, %v462
        %v481 = vunpack.c.l.b16 %v434
        %v482 = vunpack.c.l.b16 %v435
        %v483 = vunpack.c.l.b16 %v436
        %v484 = vunpack.c.l.b16 %v437
        %v485 = vunpack.c.l.b16 %v438
        %v486 = vunpack.c.l.b16 %v439
        %v487 = vunpack.c.l.b16 %v440
        %v488 = vunpack.c.l.b16 %v441
        %v489 = vunpack.c.l.b16 %v442
        %v490 = vunpack.c.l.b16 %v443
        %v491 = vunpack.c.l.b16 %v444
        %v492 = vunpack.c.l.b16 %v445
        %v493 = vunpack.c.l.b16 %v446
        %v494 = vunpack.c.l.b16 %v447
        %v495 = vunpack.c.l.b16 %v448
        %v496 = vunpack.c.l.b16 %v449
        %v497 = vpack.c.b16 %v482, %v481
        %v498 = vpack.c.b16 %v484, %v483
        %v499 = vpack.c.b16 %v486, %v485
        %v500 = vpack.c.b16 %v488, %v487
        %v501 = vpack.c.b16 %v490, %v489
        %v502 = vpack.c.b16 %v492, %v491
        %v503 = vpack.c.b16 %v494, %v493
        %v504 = vpack.c.b16 %v496, %v495
        %v513 = vunpack.c.l.b16 %v450
        %v514 = vunpack.c.l.b16 %v451
        %v515 = vunpack.c.l.b16 %v452
        %v516 = vunpack.c.l.b16 %v453
        %v517 = vunpack.c.l.b16 %v454
        %v518 = vunpack.c.l.b16 %v455
        %v519 = vunpack.c.l.b16 %v456
        %v520 = vunpack.c.l.b16 %v457
        %v521 = vpack.c.b16 %v514, %v513
        %v522 = vpack.c.b16 %v516, %v515
        %v523 = vpack.c.b16 %v518, %v517
        %v524 = vpack.c.b16 %v520, %v519
        %vm529 = vcmask 523264
        %v531 = vsel %vm529, %v497, 0
        %v534 = vsel %vm529, %v498, 0
        %v537 = vsel %vm529, %v499, 0
        %v540 = vsel %vm529, %v500, 0
        %v543 = vsel %vm529, %v501, 0
        %v546 = vsel %vm529, %v502, 0
        %v549 = vsel %vm529, %v503, 0
        %v552 = vsel %vm529, %v504, 0
        %554 = vmatprep.subr.bf16.mxu0 0
        %555 = vmatpush1.bf16.msra.mxu0 %v521
        %556 = vmatprep.subr.bf16.mxu0 0
        %557 = vmatpush1.bf16.msra.mxu0 %v522
        %558 = vmatprep.subr.bf16.mxu0 0
        %559 = vmatpush1.bf16.msra.mxu0 %v523
        %560 = vmatprep.subr.bf16.mxu0 0
        %561 = vmatpush1.bf16.msra.mxu0 %v524
        %562 = vmatprep.subr.bf16.mxu0 0
        %563 = vmatpush1.bf16.msra.mxu0 0
        %564 = vmatprep.subr.bf16.mxu0 0
        %565 = vmatpush1.bf16.msra.mxu0 0
        %566 = vmatprep.subr.bf16.mxu0 0
        %567 = vmatpush1.bf16.msra.mxu0 0
        %568 = vmatprep.subr.bf16.mxu0 0
        %569 = vmatpush1.bf16.msra.mxu0 0
        %570 = vmatprep.subr.bf16.mxu0 0
        %571 = vmatpush1.bf16.msra.mxu0 0
        %572 = vmatprep.subr.bf16.mxu0 0
        %573 = vmatpush1.bf16.msra.mxu0 0
        %574 = vmatprep.subr.bf16.mxu0 0
        %575 = vmatpush1.bf16.msra.mxu0 0
        %576 = vmatprep.subr.bf16.mxu0 0
        %577 = vmatpush1.bf16.msra.mxu0 0
        %578 = vmatprep.subr.bf16.mxu0 0
        %579 = vmatpush1.bf16.msra.mxu0 0
        %580 = vmatprep.subr.bf16.mxu0 0
        %581 = vmatpush1.bf16.msra.mxu0 0
        %582 = vmatprep.subr.bf16.mxu0 0
        %583 = vmatpush1.bf16.msra.mxu0 0
        %584 = vmatprep.subr.bf16.mxu0 0
        %585 = vmatpush1.bf16.msra.mxu0 0
        %586 = vmatprep.mubr.bf16.mxu0 0
        %587 = vmatmul.mubr.bf16.gmra.mrb[0].mxu0 %v531
        %v588 = vpop.f32.mrb[0].mxu0
        %v589 = vadd.f32 %v463, %v588
        %v590 = vpop.f32.mrb[0].mxu0
        %v591 = vpop.f32.mrb[0].mxu0
        %v592 = vadd.f32 %v463, %v591
        %v593 = vpop.f32.mrb[0].mxu0
        %594 = vmatprep.mubr.bf16.mxu0 0
        %595 = vmatmul.mubr.bf16.gmra.mrb[0].mxu0 %v534
        %v596 = vpop.f32.mrb[0].mxu0
        %v597 = vadd.f32 %v463, %v596
        %v598 = vpop.f32.mrb[0].mxu0
        %v599 = vpop.f32.mrb[0].mxu0
        %v600 = vadd.f32 %v463, %v599
        %v601 = vpop.f32.mrb[0].mxu0
        %602 = vmatprep.mubr.bf16.mxu0 0
        %603 = vmatmul.mubr.bf16.gmra.mrb[0].mxu0 %v537
        %v604 = vpop.f32.mrb[0].mxu0
        %v605 = vadd.f32 %v463, %v604
        %v606 = vpop.f32.mrb[0].mxu0
        %v607 = vpop.f32.mrb[0].mxu0
        %v608 = vadd.f32 %v463, %v607
        %v609 = vpop.f32.mrb[0].mxu0
        %610 = vmatprep.mubr.bf16.mxu0 0
        %611 = vmatmul.mubr.bf16.gmra.mrb[0].mxu0 %v540
        %v612 = vpop.f32.mrb[0].mxu0
        %v613 = vadd.f32 %v463, %v612
        %v614 = vpop.f32.mrb[0].mxu0
        %v615 = vpop.f32.mrb[0].mxu0
        %v616 = vadd.f32 %v463, %v615
        %v617 = vpop.f32.mrb[0].mxu0
        %618 = vmatprep.mubr.bf16.mxu0 0
        %619 = vmatmul.mubr.bf16.gmra.mrb[0].mxu0 %v543
        %v620 = vpop.f32.mrb[0].mxu0
        %v621 = vadd.f32 %v463, %v620
        %v622 = vpop.f32.mrb[0].mxu0
        %v623 = vpop.f32.mrb[0].mxu0
        %v624 = vadd.f32 %v463, %v623
        %v625 = vpop.f32.mrb[0].mxu0
        %626 = vmatprep.mubr.bf16.mxu0 0
        %627 = vmatmul.mubr.bf16.gmra.mrb[0].mxu0 %v546
        %v628 = vpop.f32.mrb[0].mxu0
        %v629 = vadd.f32 %v463, %v628
        %v630 = vpop.f32.mrb[0].mxu0
        %v631 = vpop.f32.mrb[0].mxu0
        %v632 = vadd.f32 %v463, %v631
        %v633 = vpop.f32.mrb[0].mxu0
        %634 = vmatprep.mubr.bf16.mxu0 0
        %635 = vmatmul.mubr.bf16.gmra.mrb[0].mxu0 %v549
        %v636 = vpop.f32.mrb[0].mxu0
        %v637 = vadd.f32 %v463, %v636
        %v638 = vpop.f32.mrb[0].mxu0
        %v639 = vpop.f32.mrb[0].mxu0
        %v640 = vadd.f32 %v463, %v639
        %v641 = vpop.f32.mrb[0].mxu0
        %642 = vmatprep.mubr.bf16.mxu0 0
        %643 = vmatmul.mubr.bf16.gmra.mrb[0].mxu0 %v552
        %v644 = vpop.f32.mrb[0].mxu0
        %v645 = vadd.f32 %v463, %v644
        %v646 = vpop.f32.mrb[0].mxu0
        %v647 = vpop.f32.mrb[0].mxu0
        %v648 = vadd.f32 %v463, %v647
        %v649 = vpop.f32.mrb[0].mxu0
        %650 = vdwg.mxu0
        %v651 = vmax.f32 %v589, 0.0
        %v652 = vmax.f32 %v592, 0.0
        %v653 = vmax.f32 %v597, 0.0
        %v654 = vmax.f32 %v600, 0.0
        %v655 = vmax.f32 %v605, 0.0
        %v656 = vmax.f32 %v608, 0.0
        %v657 = vmax.f32 %v613, 0.0
        %v658 = vmax.f32 %v616, 0.0
        %v659 = vmax.f32 %v621, 0.0
        %v660 = vmax.f32 %v624, 0.0
        %v661 = vmax.f32 %v629, 0.0
        %v662 = vmax.f32 %v632, 0.0
        %v663 = vmax.f32 %v637, 0.0
        %v664 = vmax.f32 %v640, 0.0
        %v665 = vmax.f32 %v645, 0.0
        %v666 = vmax.f32 %v648, 0.0
        %v683 = vcombine.low %v651, %v653
        %v684 = vcombine.high %v651, %v653
        %v685 = vcombine.low %v655, %v657
        %v686 = vcombine.high %v655, %v657
        %v687 = vcombine.low %v659, %v661
        %v688 = vcombine.high %v659, %v661
        %v689 = vcombine.low %v663, %v665
        %v690 = vcombine.high %v663, %v665
        %v692 = vunpack.c.l.s4 1966171168
        %v693 = vunpack.c.0.s8 %v692
        %v694 = vlaneseq
        %v695 = vshrl.u32 %v694, 7
        %v696 = vsub.s32 %v693, %v695
        %v697 = vrot.slane %v683, %v696
        %v699 = vunpack.c.l.s4 1966171168
        %v700 = vunpack.c.0.s8 %v699
        %v701 = vlaneseq
        %v702 = vshrl.u32 %v701, 7
        %v703 = vsub.s32 %v700, %v702
        %v704 = vrot.slane %v684, %v703
        %v706 = vunpack.c.l.s4 1966171168
        %v707 = vunpack.c.0.s8 %v706
        %v708 = vlaneseq
        %v709 = vshrl.u32 %v708, 7
        %v710 = vsub.s32 %v707, %v709
        %v711 = vrot.slane %v685, %v710
        %v713 = vunpack.c.l.s4 1966171168
        %v714 = vunpack.c.0.s8 %v713
        %v715 = vlaneseq
        %v716 = vshrl.u32 %v715, 7
        %v717 = vsub.s32 %v714, %v716
        %v718 = vrot.slane %v686, %v717
        %v720 = vunpack.c.l.s4 1966171168
        %v721 = vunpack.c.0.s8 %v720
        %v722 = vlaneseq
        %v723 = vshrl.u32 %v722, 7
        %v724 = vsub.s32 %v721, %v723
        %v725 = vrot.slane %v687, %v724
        %v727 = vunpack.c.l.s4 1966171168
        %v728 = vunpack.c.0.s8 %v727
        %v729 = vlaneseq
        %v730 = vshrl.u32 %v729, 7
        %v731 = vsub.s32 %v728, %v730
        %v732 = vrot.slane %v688, %v731
        %v734 = vunpack.c.l.s4 1966171168
        %v735 = vunpack.c.0.s8 %v734
        %v736 = vlaneseq
        %v737 = vshrl.u32 %v736, 7
        %v738 = vsub.s32 %v735, %v737
        %v739 = vrot.slane %v689, %v738
        %v741 = vunpack.c.l.s4 1966171168
        %v742 = vunpack.c.0.s8 %v741
        %v743 = vlaneseq
        %v744 = vshrl.u32 %v743, 7
        %v745 = vsub.s32 %v742, %v744
        %v746 = vrot.slane %v690, %v745
        %v747 = vcombine.low %v697, %v711
        %v748 = vcombine.high %v697, %v711
        %v749 = vcombine.low %v704, %v718
        %v750 = vcombine.high %v704, %v718
        %v751 = vcombine.low %v725, %v739
        %v752 = vcombine.high %v725, %v739
        %v753 = vcombine.low %v732, %v746
        %v754 = vcombine.high %v732, %v746
        %v756 = vunpack.c.l.s4 1966171168
        %v757 = vunpack.c.0.s8 %v756
        %v758 = vlaneseq
        %v759 = vshrl.u32 %v758, 7
        %v760 = vsub.s32 %v757, %v759
        %v761 = vrot.slane %v747, %v760
        %v763 = vunpack.c.l.s4 1966171168
        %v764 = vunpack.c.0.s8 %v763
        %v765 = vlaneseq
        %v766 = vshrl.u32 %v765, 7
        %v767 = vsub.s32 %v764, %v766
        %v768 = vrot.slane %v749, %v767
        %v770 = vunpack.c.l.s4 1966171168
        %v771 = vunpack.c.0.s8 %v770
        %v772 = vlaneseq
        %v773 = vshrl.u32 %v772, 7
        %v774 = vsub.s32 %v771, %v773
        %v775 = vrot.slane %v748, %v774
        %v777 = vunpack.c.l.s4 1966171168
        %v778 = vunpack.c.0.s8 %v777
        %v779 = vlaneseq
        %v780 = vshrl.u32 %v779, 7
        %v781 = vsub.s32 %v778, %v780
        %v782 = vrot.slane %v750, %v781
        %v784 = vunpack.c.l.s4 1966171168
        %v785 = vunpack.c.0.s8 %v784
        %v786 = vlaneseq
        %v787 = vshrl.u32 %v786, 7
        %v788 = vsub.s32 %v785, %v787
        %v789 = vrot.slane %v751, %v788
        %v791 = vunpack.c.l.s4 1966171168
        %v792 = vunpack.c.0.s8 %v791
        %v793 = vlaneseq
        %v794 = vshrl.u32 %v793, 7
        %v795 = vsub.s32 %v792, %v794
        %v796 = vrot.slane %v753, %v795
        %v798 = vunpack.c.l.s4 1966171168
        %v799 = vunpack.c.0.s8 %v798
        %v800 = vlaneseq
        %v801 = vshrl.u32 %v800, 7
        %v802 = vsub.s32 %v799, %v801
        %v803 = vrot.slane %v752, %v802
        %v805 = vunpack.c.l.s4 1966171168
        %v806 = vunpack.c.0.s8 %v805
        %v807 = vlaneseq
        %v808 = vshrl.u32 %v807, 7
        %v809 = vsub.s32 %v806, %v808
        %v810 = vrot.slane %v754, %v809
        %v811 = vcombine.low %v761, %v789
        %v812 = vcombine.high %v761, %v789
        %v813 = vcombine.low %v768, %v796
        %v814 = vcombine.high %v768, %v796
        %v815 = vcombine.low %v775, %v803
        %v816 = vcombine.high %v775, %v803
        %v817 = vcombine.low %v782, %v810
        %v818 = vcombine.high %v782, %v810
        %v819 = vcombine.low %v652, %v654
        %v820 = vcombine.high %v652, %v654
        %v821 = vcombine.low %v656, %v658
        %v822 = vcombine.high %v656, %v658
        %v823 = vcombine.low %v660, %v662
        %v824 = vcombine.high %v660, %v662
        %v825 = vcombine.low %v664, %v666
        %v826 = vcombine.high %v664, %v666
        %v828 = vunpack.c.l.s4 1966171168
        %v829 = vunpack.c.0.s8 %v828
        %v830 = vlaneseq
        %v831 = vshrl.u32 %v830, 7
        %v832 = vsub.s32 %v829, %v831
        %v833 = vrot.slane %v819, %v832
        %v835 = vunpack.c.l.s4 1966171168
        %v836 = vunpack.c.0.s8 %v835
        %v837 = vlaneseq
        %v838 = vshrl.u32 %v837, 7
        %v839 = vsub.s32 %v836, %v838
        %v840 = vrot.slane %v820, %v839
        %v842 = vunpack.c.l.s4 1966171168
        %v843 = vunpack.c.0.s8 %v842
        %v844 = vlaneseq
        %v845 = vshrl.u32 %v844, 7
        %v846 = vsub.s32 %v843, %v845
        %v847 = vrot.slane %v821, %v846
        %v849 = vunpack.c.l.s4 1966171168
        %v850 = vunpack.c.0.s8 %v849
        %v851 = vlaneseq
        %v852 = vshrl.u32 %v851, 7
        %v853 = vsub.s32 %v850, %v852
        %v854 = vrot.slane %v822, %v853
        %v856 = vunpack.c.l.s4 1966171168
        %v857 = vunpack.c.0.s8 %v856
        %v858 = vlaneseq
        %v859 = vshrl.u32 %v858, 7
        %v860 = vsub.s32 %v857, %v859
        %v861 = vrot.slane %v823, %v860
        %v863 = vunpack.c.l.s4 1966171168
        %v864 = vunpack.c.0.s8 %v863
        %v865 = vlaneseq
        %v866 = vshrl.u32 %v865, 7
        %v867 = vsub.s32 %v864, %v866
        %v868 = vrot.slane %v824, %v867
        %v870 = vunpack.c.l.s4 1966171168
        %v871 = vunpack.c.0.s8 %v870
        %v872 = vlaneseq
        %v873 = vshrl.u32 %v872, 7
        %v874 = vsub.s32 %v871, %v873
        %v875 = vrot.slane %v825, %v874
        %v877 = vunpack.c.l.s4 1966171168
        %v878 = vunpack.c.0.s8 %v877
        %v879 = vlaneseq
        %v880 = vshrl.u32 %v879, 7
        %v881 = vsub.s32 %v878, %v880
        %v882 = vrot.slane %v826, %v881
        %v883 = vcombine.low %v833, %v847
        %v884 = vcombine.high %v833, %v847
        %v885 = vcombine.low %v840, %v854
        %v886 = vcombine.high %v840, %v854
        %v887 = vcombine.low %v861, %v875
        %v888 = vcombine.high %v861, %v875
        %v889 = vcombine.low %v868, %v882
        %v890 = vcombine.high %v868, %v882
        %v892 = vunpack.c.l.s4 1966171168
        %v893 = vunpack.c.0.s8 %v892
        %v894 = vlaneseq
        %v895 = vshrl.u32 %v894, 7
        %v896 = vsub.s32 %v893, %v895
        %v897 = vrot.slane %v883, %v896
        %v899 = vunpack.c.l.s4 1966171168
        %v900 = vunpack.c.0.s8 %v899
        %v901 = vlaneseq
        %v902 = vshrl.u32 %v901, 7
        %v903 = vsub.s32 %v900, %v902
        %v904 = vrot.slane %v885, %v903
        %v906 = vunpack.c.l.s4 1966171168
        %v907 = vunpack.c.0.s8 %v906
        %v908 = vlaneseq
        %v909 = vshrl.u32 %v908, 7
        %v910 = vsub.s32 %v907, %v909
        %v911 = vrot.slane %v884, %v910
        %v913 = vunpack.c.l.s4 1966171168
        %v914 = vunpack.c.0.s8 %v913
        %v915 = vlaneseq
        %v916 = vshrl.u32 %v915, 7
        %v917 = vsub.s32 %v914, %v916
        %v918 = vrot.slane %v886, %v917
        %v920 = vunpack.c.l.s4 1966171168
        %v921 = vunpack.c.0.s8 %v920
        %v922 = vlaneseq
        %v923 = vshrl.u32 %v922, 7
        %v924 = vsub.s32 %v921, %v923
        %v925 = vrot.slane %v887, %v924
        %v927 = vunpack.c.l.s4 1966171168
        %v928 = vunpack.c.0.s8 %v927
        %v929 = vlaneseq
        %v930 = vshrl.u32 %v929, 7
        %v931 = vsub.s32 %v928, %v930
        %v932 = vrot.slane %v889, %v931
        %v934 = vunpack.c.l.s4 1966171168
        %v935 = vunpack.c.0.s8 %v934
        %v936 = vlaneseq
        %v937 = vshrl.u32 %v936, 7
        %v938 = vsub.s32 %v935, %v937
        %v939 = vrot.slane %v888, %v938
        %v941 = vunpack.c.l.s4 1966171168
        %v942 = vunpack.c.0.s8 %v941
        %v943 = vlaneseq
        %v944 = vshrl.u32 %v943, 7
        %v945 = vsub.s32 %v942, %v944
        %v946 = vrot.slane %v890, %v945
        %v947 = vcombine.low %v897, %v925
        %v948 = vcombine.high %v897, %v925
        %v949 = vcombine.low %v904, %v932
        %v950 = vcombine.high %v904, %v932
        %v951 = vcombine.low %v911, %v939
        %v952 = vcombine.high %v911, %v939
        %v953 = vcombine.low %v918, %v946
        %v954 = vcombine.high %v918, %v946
        %v971 = vpack.c.bf16 %v811, %v811
        %v972 = vpack.c.bf16 %v815, %v815
        %v973 = vpack.c.bf16 %v812, %v812
        %v974 = vpack.c.bf16 %v816, %v816
        %v975 = vpack.c.bf16 %v813, %v813
        %v976 = vpack.c.bf16 %v817, %v817
        %v977 = vpack.c.bf16 %v814, %v814
        %v978 = vpack.c.bf16 %v818, %v818
        %v979 = vpack.c.bf16 %v947, %v947
        %v980 = vpack.c.bf16 %v951, %v951
        %v981 = vpack.c.bf16 %v948, %v948
        %v982 = vpack.c.bf16 %v952, %v952
        %v983 = vpack.c.bf16 %v949, %v949
        %v984 = vpack.c.bf16 %v953, %v953
        %v985 = vpack.c.bf16 %v950, %v950
        %v986 = vpack.c.bf16 %v954, %v954
        %v987 = vld [vmem:[%s353] sm:$0xff]
        %v988 = vld [vmem:[%s353 + $0x8] sm:$0xff]
        %v989 = vld [vmem:[%s353 + $0x10] sm:$0xff]
        %v990 = vld [vmem:[%s353 + $0x18] sm:$0xff]
        %v991 = vld [vmem:[%s353 + $0x20] sm:$0xff]
        %v992 = vld [vmem:[%s353 + $0x28] sm:$0xff]
        %v993 = vld [vmem:[%s353 + $0x30] sm:$0xff]
        %v994 = vld [vmem:[%s353 + $0x38] sm:$0xff]
        %v995 = vld [vmem:[%s353 + $0x40] sm:$0xff]
        %v996 = vld [vmem:[%s353 + $0x48] sm:$0xff]
        %v997 = vld [vmem:[%s353 + $0x50] sm:$0xff]
        %v998 = vld [vmem:[%s353 + $0x58] sm:$0xff]
        %v999 = vld [vmem:[%s353 + $0x60] sm:$0xff]
        %v1000 = vld [vmem:[%s353 + $0x68] sm:$0xff]
        %v1001 = vld [vmem:[%s353 + $0x70] sm:$0xff]
        %v1002 = vld [vmem:[%s353 + $0x78] sm:$0xff]
        %v1003 = vld [vmem:[%s353 + $0x80] sm:$0xff]
        %v1004 = vld [vmem:[%s353 + $0x88] sm:$0xff]
        %v1005 = vld [vmem:[%s353 + $0x90] sm:$0xff]
        %v1006 = vld [vmem:[%s353 + $0x98] sm:$0xff]
        %v1007 = vld [vmem:[%s353 + $0xa0] sm:$0xff]
        %v1008 = vld [vmem:[%s353 + $0xa8] sm:$0xff]
        %v1009 = vld [vmem:[%s353 + $0xb0] sm:$0xff]
        %v1010 = vld [vmem:[%s353 + $0xb8] sm:$0xff]
        %v1011 = vld [vmem:[%s353 + $0xc0] sm:$0xff]
        %v1012 = vld [vmem:[%s353 + $0xc8] sm:$0xff]
        %v1013 = vld [vmem:[%s353 + $0xd0] sm:$0xff]
        %v1014 = vld [vmem:[%s353 + $0xd8] sm:$0xff]
        %v1015 = vld [vmem:[%s353 + $0xe0] sm:$0xff]
        %v1016 = vld [vmem:[%s353 + $0xe8] sm:$0xff]
        %v1017 = vld [vmem:[%s353 + $0xf0] sm:$0xff]
        %v1018 = vld [vmem:[%s353 + $0xf8] sm:$0xff]
        %v1019 = vld [vmem:[%s353 + $0x100] sm:$0xff]
        %v1020 = vld [vmem:[%s353 + $0x108] sm:$0xff]
        %v1021 = vld [vmem:[%s353 + $0x110] sm:$0xff]
        %v1022 = vld [vmem:[%s353 + $0x118] sm:$0xff]
        %v1023 = vld [vmem:[%s353 + $0x120] sm:$0xff]
        %v1024 = vld [vmem:[%s353 + $0x128] sm:$0xff]
        %v1025 = vld [vmem:[%s353 + $0x130] sm:$0xff]
        %v1026 = vld [vmem:[%s353 + $0x138] sm:$0xff]
        %v1027 = vld [vmem:[%s353 + $0x140] sm:$0xff]
        %v1028 = vld [vmem:[%s353 + $0x148] sm:$0xff]
        %v1029 = vld [vmem:[%s353 + $0x150] sm:$0xff]
        %v1030 = vld [vmem:[%s353 + $0x158] sm:$0xff]
        %v1031 = vld [vmem:[%s353 + $0x160] sm:$0xff]
        %v1032 = vld [vmem:[%s353 + $0x168] sm:$0xff]
        %v1033 = vld [vmem:[%s353 + $0x170] sm:$0xff]
        %v1034 = vld [vmem:[%s353 + $0x178] sm:$0xff]
        %v1035 = vld [vmem:[%s353 + $0x180] sm:$0xff]
        %v1036 = vld [vmem:[%s353 + $0x188] sm:$0xff]
        %v1037 = vld [vmem:[%s353 + $0x190] sm:$0xff]
        %v1038 = vld [vmem:[%s353 + $0x198] sm:$0xff]
        %v1039 = vld [vmem:[%s353 + $0x1a0] sm:$0xff]
        %v1040 = vld [vmem:[%s353 + $0x1a8] sm:$0xff]
        %v1041 = vld [vmem:[%s353 + $0x1b0] sm:$0xff]
        %v1042 = vld [vmem:[%s353 + $0x1b8] sm:$0xff]
        %v1043 = vld [vmem:[%s353 + $0x1c0] sm:$0xff]
        %v1044 = vld [vmem:[%s353 + $0x1c8] sm:$0xff]
        %v1045 = vld [vmem:[%s353 + $0x1d0] sm:$0xff]
        %v1046 = vld [vmem:[%s353 + $0x1d8] sm:$0xff]
        %v1047 = vld [vmem:[%s353 + $0x1e0] sm:$0xff]
        %v1048 = vld [vmem:[%s353 + $0x1e8] sm:$0xff]
        %v1049 = vld [vmem:[%s353 + $0x1f0] sm:$0xff]
        %v1050 = vld [vmem:[%s353 + $0x1f8] sm:$0xff]
        %v1051 = vld [vmem:[%s353 + $0x200] sm:$0xff]
        %v1052 = vld [vmem:[%s353 + $0x208] sm:$0xff]
        %v1053 = vld [vmem:[%s353 + $0x210] sm:$0xff]
        %v1054 = vld [vmem:[%s353 + $0x218] sm:$0xff]
        %v1055 = vld [vmem:[%s353 + $0x220] sm:$0xff]
        %v1056 = vld [vmem:[%s353 + $0x228] sm:$0xff]
        %v1057 = vld [vmem:[%s353 + $0x230] sm:$0xff]
        %v1058 = vld [vmem:[%s353 + $0x238] sm:$0xff]
        %v1059 = vld [vmem:[%s353 + $0x240] sm:$0xff]
        %v1060 = vld [vmem:[%s353 + $0x248] sm:$0xff]
        %v1061 = vld [vmem:[%s353 + $0x250] sm:$0xff]
        %v1062 = vld [vmem:[%s353 + $0x258] sm:$0xff]
        %v1063 = vld [vmem:[%s353 + $0x260] sm:$0xff]
        %v1064 = vld [vmem:[%s353 + $0x268] sm:$0xff]
        %v1065 = vld [vmem:[%s353 + $0x270] sm:$0xff]
        %v1066 = vld [vmem:[%s353 + $0x278] sm:$0xff]
        %v1067 = vld [vmem:[%s353 + $0x280] sm:$0xff]
        %v1068 = vld [vmem:[%s353 + $0x288] sm:$0xff]
        %v1069 = vld [vmem:[%s353 + $0x290] sm:$0xff]
        %v1070 = vld [vmem:[%s353 + $0x298] sm:$0xff]
        %v1071 = vld [vmem:[%s353 + $0x2a0] sm:$0xff]
        %v1072 = vld [vmem:[%s353 + $0x2a8] sm:$0xff]
        %v1073 = vld [vmem:[%s353 + $0x2b0] sm:$0xff]
        %v1074 = vld [vmem:[%s353 + $0x2b8] sm:$0xff]
        %v1075 = vld [vmem:[%s353 + $0x2c0] sm:$0xff]
        %v1076 = vld [vmem:[%s353 + $0x2c8] sm:$0xff]
        %v1077 = vld [vmem:[%s353 + $0x2d0] sm:$0xff]
        %v1078 = vld [vmem:[%s353 + $0x2d8] sm:$0xff]
        %v1079 = vld [vmem:[%s353 + $0x2e0] sm:$0xff]
        %v1080 = vld [vmem:[%s353 + $0x2e8] sm:$0xff]
        %v1081 = vld [vmem:[%s353 + $0x2f0] sm:$0xff]
        %v1082 = vld [vmem:[%s353 + $0x2f8] sm:$0xff]
        %v1083 = vld [vmem:[%s353 + $0x300] sm:$0xff]
        %v1084 = vld [vmem:[%s353 + $0x308] sm:$0xff]
        %v1085 = vld [vmem:[%s353 + $0x310] sm:$0xff]
        %v1086 = vld [vmem:[%s353 + $0x318] sm:$0xff]
        %v1087 = vld [vmem:[%s353 + $0x320] sm:$0xff]
        %v1088 = vld [vmem:[%s353 + $0x328] sm:$0xff]
        %v1089 = vld [vmem:[%s353 + $0x330] sm:$0xff]
        %v1090 = vld [vmem:[%s353 + $0x338] sm:$0xff]
        %v1091 = vld [vmem:[%s353 + $0x340] sm:$0xff]
        %v1092 = vld [vmem:[%s353 + $0x348] sm:$0xff]
        %v1093 = vld [vmem:[%s353 + $0x350] sm:$0xff]
        %v1094 = vld [vmem:[%s353 + $0x358] sm:$0xff]
        %v1095 = vld [vmem:[%s353 + $0x360] sm:$0xff]
        %v1096 = vld [vmem:[%s353 + $0x368] sm:$0xff]
        %v1097 = vld [vmem:[%s353 + $0x370] sm:$0xff]
        %v1098 = vld [vmem:[%s353 + $0x378] sm:$0xff]
        %v1099 = vld [vmem:[%s353 + $0x380] sm:$0xff]
        %v1100 = vld [vmem:[%s353 + $0x388] sm:$0xff]
        %v1101 = vld [vmem:[%s353 + $0x390] sm:$0xff]
        %v1102 = vld [vmem:[%s353 + $0x398] sm:$0xff]
        %v1103 = vld [vmem:[%s353 + $0x3a0] sm:$0xff]
        %v1104 = vld [vmem:[%s353 + $0x3a8] sm:$0xff]
        %v1105 = vld [vmem:[%s353 + $0x3b0] sm:$0xff]
        %v1106 = vld [vmem:[%s353 + $0x3b8] sm:$0xff]
        %v1107 = vld [vmem:[%s353 + $0x3c0] sm:$0xff]
        %v1108 = vld [vmem:[%s353 + $0x3c8] sm:$0xff]
        %v1109 = vld [vmem:[%s353 + $0x3d0] sm:$0xff]
        %v1110 = vld [vmem:[%s353 + $0x3d8] sm:$0xff]
        %v1111 = vld [vmem:[%s353 + $0x3e0] sm:$0xff]
        %v1112 = vld [vmem:[%s353 + $0x3e8] sm:$0xff]
        %v1113 = vld [vmem:[%s353 + $0x3f0] sm:$0xff]
        %v1114 = vld [vmem:[%s353 + $0x3f8] sm:$0xff]
        %v1115 = vld [vmem:[%s353 + $0x400] sm:$0xff]
        %v1116 = vld [vmem:[%s353 + $0x408] sm:$0xff]
        %v1117 = vld [vmem:[%s353 + $0x410] sm:$0xff]
        %v1118 = vld [vmem:[%s353 + $0x418] sm:$0xff]
        %v1119 = vld [vmem:[%s353 + $0x420] sm:$0xff]
        %v1120 = vld [vmem:[%s353 + $0x428] sm:$0xff]
        %v1121 = vld [vmem:[%s353 + $0x430] sm:$0xff]
        %v1122 = vld [vmem:[%s353 + $0x438] sm:$0xff]
        %v1123 = vld [vmem:[%s353 + $0x440] sm:$0xff]
        %v1124 = vld [vmem:[%s353 + $0x448] sm:$0xff]
        %v1125 = vld [vmem:[%s353 + $0x450] sm:$0xff]
        %v1126 = vld [vmem:[%s353 + $0x458] sm:$0xff]
        %v1127 = vld [vmem:[%s353 + $0x460] sm:$0xff]
        %v1128 = vld [vmem:[%s353 + $0x468] sm:$0xff]
        %v1129 = vld [vmem:[%s353 + $0x470] sm:$0xff]
        %v1130 = vld [vmem:[%s353 + $0x478] sm:$0xff]
        %v1131 = vld [vmem:[%s353 + $0x480] sm:$0xff]
        %v1132 = vld [vmem:[%s353 + $0x488] sm:$0xff]
        %v1133 = vld [vmem:[%s353 + $0x490] sm:$0xff]
        %v1134 = vld [vmem:[%s353 + $0x498] sm:$0xff]
        %v1135 = vld [vmem:[%s353 + $0x4a0] sm:$0xff]
        %v1136 = vld [vmem:[%s353 + $0x4a8] sm:$0xff]
        %v1137 = vld [vmem:[%s353 + $0x4b0] sm:$0xff]
        %v1138 = vld [vmem:[%s353 + $0x4b8] sm:$0xff]
        %v1139 = vld [vmem:[%s353 + $0x4c0] sm:$0xff]
        %v1140 = vld [vmem:[%s353 + $0x4c8] sm:$0xff]
        %v1141 = vld [vmem:[%s353 + $0x4d0] sm:$0xff]
        %v1142 = vld [vmem:[%s353 + $0x4d8] sm:$0xff]
        %v1143 = vld [vmem:[%s353 + $0x4e0] sm:$0xff]
        %v1144 = vld [vmem:[%s353 + $0x4e8] sm:$0xff]
        %v1145 = vld [vmem:[%s353 + $0x4f0] sm:$0xff]
        %v1146 = vld [vmem:[%s353 + $0x4f8] sm:$0xff]
        %v1147 = vld [vmem:[%s353 + $0x500] sm:$0xff]
        %v1148 = vld [vmem:[%s353 + $0x508] sm:$0xff]
        %v1149 = vld [vmem:[%s353 + $0x510] sm:$0xff]
        %v1150 = vld [vmem:[%s353 + $0x518] sm:$0xff]
        %v1151 = vld [vmem:[%s353 + $0x520] sm:$0xff]
        %v1152 = vld [vmem:[%s353 + $0x528] sm:$0xff]
        %v1153 = vld [vmem:[%s353 + $0x530] sm:$0xff]
        %v1154 = vld [vmem:[%s353 + $0x538] sm:$0xff]
        %v1155 = vld [vmem:[%s353 + $0x540] sm:$0xff]
        %v1156 = vld [vmem:[%s353 + $0x548] sm:$0xff]
        %v1157 = vld [vmem:[%s353 + $0x550] sm:$0xff]
        %v1158 = vld [vmem:[%s353 + $0x558] sm:$0xff]
        %v1159 = vld [vmem:[%s353 + $0x560] sm:$0xff]
        %v1160 = vld [vmem:[%s353 + $0x568] sm:$0xff]
        %v1161 = vld [vmem:[%s353 + $0x570] sm:$0xff]
        %v1162 = vld [vmem:[%s353 + $0x578] sm:$0xff]
        %v1163 = vld [vmem:[%s353 + $0x580] sm:$0xff]
        %v1164 = vld [vmem:[%s353 + $0x588] sm:$0xff]
        %v1165 = vld [vmem:[%s353 + $0x590] sm:$0xff]
        %v1166 = vld [vmem:[%s353 + $0x598] sm:$0xff]
        %v1167 = vld [vmem:[%s353 + $0x5a0] sm:$0xff]
        %v1168 = vld [vmem:[%s353 + $0x5a8] sm:$0xff]
        %v1169 = vld [vmem:[%s353 + $0x5b0] sm:$0xff]
        %v1170 = vld [vmem:[%s353 + $0x5b8] sm:$0xff]
        %v1171 = vld [vmem:[%s353 + $0x5c0] sm:$0xff]
        %v1172 = vld [vmem:[%s353 + $0x5c8] sm:$0xff]
        %v1173 = vld [vmem:[%s353 + $0x5d0] sm:$0xff]
        %v1174 = vld [vmem:[%s353 + $0x5d8] sm:$0xff]
        %v1175 = vld [vmem:[%s353 + $0x5e0] sm:$0xff]
        %v1176 = vld [vmem:[%s353 + $0x5e8] sm:$0xff]
        %v1177 = vld [vmem:[%s353 + $0x5f0] sm:$0xff]
        %v1178 = vld [vmem:[%s353 + $0x5f8] sm:$0xff]
        %v1179 = vld [vmem:[%s353 + $0x600] sm:$0xff]
        %v1180 = vld [vmem:[%s353 + $0x608] sm:$0xff]
        %v1181 = vld [vmem:[%s353 + $0x610] sm:$0xff]
        %v1182 = vld [vmem:[%s353 + $0x618] sm:$0xff]
        %v1183 = vld [vmem:[%s353 + $0x620] sm:$0xff]
        %v1184 = vld [vmem:[%s353 + $0x628] sm:$0xff]
        %v1185 = vld [vmem:[%s353 + $0x630] sm:$0xff]
        %v1186 = vld [vmem:[%s353 + $0x638] sm:$0xff]
        %v1187 = vld [vmem:[%s353 + $0x640] sm:$0xff]
        %v1188 = vld [vmem:[%s353 + $0x648] sm:$0xff]
        %v1189 = vld [vmem:[%s353 + $0x650] sm:$0xff]
        %v1190 = vld [vmem:[%s353 + $0x658] sm:$0xff]
        %v1191 = vld [vmem:[%s353 + $0x660] sm:$0xff]
        %v1192 = vld [vmem:[%s353 + $0x668] sm:$0xff]
        %v1193 = vld [vmem:[%s353 + $0x670] sm:$0xff]
        %v1194 = vld [vmem:[%s353 + $0x678] sm:$0xff]
        %v1195 = vld [vmem:[%s353 + $0x680] sm:$0xff]
        %v1196 = vld [vmem:[%s353 + $0x688] sm:$0xff]
        %v1197 = vld [vmem:[%s353 + $0x690] sm:$0xff]
        %v1198 = vld [vmem:[%s353 + $0x698] sm:$0xff]
        %v1199 = vld [vmem:[%s353 + $0x6a0] sm:$0xff]
        %v1200 = vld [vmem:[%s353 + $0x6a8] sm:$0xff]
        %v1201 = vld [vmem:[%s353 + $0x6b0] sm:$0xff]
        %v1202 = vld [vmem:[%s353 + $0x6b8] sm:$0xff]
        %v1203 = vld [vmem:[%s353 + $0x6c0] sm:$0xff]
        %v1204 = vld [vmem:[%s353 + $0x6c8] sm:$0xff]
        %v1205 = vld [vmem:[%s353 + $0x6d0] sm:$0xff]
        %v1206 = vld [vmem:[%s353 + $0x6d8] sm:$0xff]
        %v1207 = vld [vmem:[%s353 + $0x6e0] sm:$0xff]
        %v1208 = vld [vmem:[%s353 + $0x6e8] sm:$0xff]
        %v1209 = vld [vmem:[%s353 + $0x6f0] sm:$0xff]
        %v1210 = vld [vmem:[%s353 + $0x6f8] sm:$0xff]
        %v1211 = vld [vmem:[%s353 + $0x700] sm:$0xff]
        %v1212 = vld [vmem:[%s353 + $0x708] sm:$0xff]
        %v1213 = vld [vmem:[%s353 + $0x710] sm:$0xff]
        %v1214 = vld [vmem:[%s353 + $0x718] sm:$0xff]
        %v1215 = vld [vmem:[%s353 + $0x720] sm:$0xff]
        %v1216 = vld [vmem:[%s353 + $0x728] sm:$0xff]
        %v1217 = vld [vmem:[%s353 + $0x730] sm:$0xff]
        %v1218 = vld [vmem:[%s353 + $0x738] sm:$0xff]
        %v1219 = vld [vmem:[%s353 + $0x740] sm:$0xff]
        %v1220 = vld [vmem:[%s353 + $0x748] sm:$0xff]
        %v1221 = vld [vmem:[%s353 + $0x750] sm:$0xff]
        %v1222 = vld [vmem:[%s353 + $0x758] sm:$0xff]
        %v1223 = vld [vmem:[%s353 + $0x760] sm:$0xff]
        %v1224 = vld [vmem:[%s353 + $0x768] sm:$0xff]
        %v1225 = vld [vmem:[%s353 + $0x770] sm:$0xff]
        %v1226 = vld [vmem:[%s353 + $0x778] sm:$0xff]
        %v1227 = vld [vmem:[%s353 + $0x780] sm:$0xff]
        %v1228 = vld [vmem:[%s353 + $0x788] sm:$0xff]
        %v1229 = vld [vmem:[%s353 + $0x790] sm:$0xff]
        %v1230 = vld [vmem:[%s353 + $0x798] sm:$0xff]
        %v1231 = vld [vmem:[%s353 + $0x7a0] sm:$0xff]
        %v1232 = vld [vmem:[%s353 + $0x7a8] sm:$0xff]
        %v1233 = vld [vmem:[%s353 + $0x7b0] sm:$0xff]
        %v1234 = vld [vmem:[%s353 + $0x7b8] sm:$0xff]
        %v1235 = vld [vmem:[%s353 + $0x7c0] sm:$0xff]
        %v1236 = vld [vmem:[%s353 + $0x7c8] sm:$0xff]
        %v1237 = vld [vmem:[%s353 + $0x7d0] sm:$0xff]
        %v1238 = vld [vmem:[%s353 + $0x7d8] sm:$0xff]
        %v1239 = vld [vmem:[%s353 + $0x7e0] sm:$0xff]
        %v1240 = vld [vmem:[%s353 + $0x7e8] sm:$0xff]
        %v1241 = vld [vmem:[%s353 + $0x7f0] sm:$0xff]
        %v1242 = vld [vmem:[%s353 + $0x7f8] sm:$0xff]
        %v1243 = vunpack.c.l.s8.bf16 %v987
        %v1244 = vunpack.c.l.s8.bf16 %v988
        %v1245 = vunpack.c.l.s8.bf16 %v989
        %v1246 = vunpack.c.l.s8.bf16 %v990
        %v1247 = vunpack.c.h.s8.bf16 %v987
        %v1248 = vunpack.c.h.s8.bf16 %v988
        %v1249 = vunpack.c.h.s8.bf16 %v989
        %v1250 = vunpack.c.h.s8.bf16 %v990
        %v1251 = vunpack.c.l.s8.bf16 %v991
        %v1252 = vunpack.c.l.s8.bf16 %v992
        %v1253 = vunpack.c.l.s8.bf16 %v993
        %v1254 = vunpack.c.l.s8.bf16 %v994
        %v1255 = vunpack.c.h.s8.bf16 %v991
        %v1256 = vunpack.c.h.s8.bf16 %v992
        %v1257 = vunpack.c.h.s8.bf16 %v993
        %v1258 = vunpack.c.h.s8.bf16 %v994
        %v1259 = vunpack.c.l.s8.bf16 %v995
        %v1260 = vunpack.c.l.s8.bf16 %v996
        %v1261 = vunpack.c.l.s8.bf16 %v997
        %v1262 = vunpack.c.l.s8.bf16 %v998
        %v1263 = vunpack.c.h.s8.bf16 %v995
        %v1264 = vunpack.c.h.s8.bf16 %v996
        %v1265 = vunpack.c.h.s8.bf16 %v997
        %v1266 = vunpack.c.h.s8.bf16 %v998
        %v1267 = vunpack.c.l.s8.bf16 %v999
        %v1268 = vunpack.c.l.s8.bf16 %v1000
        %v1269 = vunpack.c.l.s8.bf16 %v1001
        %v1270 = vunpack.c.l.s8.bf16 %v1002
        %v1271 = vunpack.c.h.s8.bf16 %v999
        %v1272 = vunpack.c.h.s8.bf16 %v1000
        %v1273 = vunpack.c.h.s8.bf16 %v1001
        %v1274 = vunpack.c.h.s8.bf16 %v1002
        %v1275 = vunpack.c.l.s8.bf16 %v1003
        %v1276 = vunpack.c.l.s8.bf16 %v1004
        %v1277 = vunpack.c.l.s8.bf16 %v1005
        %v1278 = vunpack.c.l.s8.bf16 %v1006
        %v1279 = vunpack.c.h.s8.bf16 %v1003
        %v1280 = vunpack.c.h.s8.bf16 %v1004
        %v1281 = vunpack.c.h.s8.bf16 %v1005
        %v1282 = vunpack.c.h.s8.bf16 %v1006
        %v1283 = vunpack.c.l.s8.bf16 %v1007
        %v1284 = vunpack.c.l.s8.bf16 %v1008
        %v1285 = vunpack.c.l.s8.bf16 %v1009
        %v1286 = vunpack.c.l.s8.bf16 %v1010
        %v1287 = vunpack.c.h.s8.bf16 %v1007
        %v1288 = vunpack.c.h.s8.bf16 %v1008
        %v1289 = vunpack.c.h.s8.bf16 %v1009
        %v1290 = vunpack.c.h.s8.bf16 %v1010
        %v1291 = vunpack.c.l.s8.bf16 %v1011
        %v1292 = vunpack.c.l.s8.bf16 %v1012
        %v1293 = vunpack.c.l.s8.bf16 %v1013
        %v1294 = vunpack.c.l.s8.bf16 %v1014
        %v1295 = vunpack.c.h.s8.bf16 %v1011
        %v1296 = vunpack.c.h.s8.bf16 %v1012
        %v1297 = vunpack.c.h.s8.bf16 %v1013
        %v1298 = vunpack.c.h.s8.bf16 %v1014
        %v1299 = vunpack.c.l.s8.bf16 %v1015
        %v1300 = vunpack.c.l.s8.bf16 %v1016
        %v1301 = vunpack.c.l.s8.bf16 %v1017
        %v1302 = vunpack.c.l.s8.bf16 %v1018
        %v1303 = vunpack.c.h.s8.bf16 %v1015
        %v1304 = vunpack.c.h.s8.bf16 %v1016
        %v1305 = vunpack.c.h.s8.bf16 %v1017
        %v1306 = vunpack.c.h.s8.bf16 %v1018
        %v1307 = vunpack.c.l.s8.bf16 %v1019
        %v1308 = vunpack.c.l.s8.bf16 %v1020
        %v1309 = vunpack.c.l.s8.bf16 %v1021
        %v1310 = vunpack.c.l.s8.bf16 %v1022
        %v1311 = vunpack.c.h.s8.bf16 %v1019
        %v1312 = vunpack.c.h.s8.bf16 %v1020
        %v1313 = vunpack.c.h.s8.bf16 %v1021
        %v1314 = vunpack.c.h.s8.bf16 %v1022
        %v1315 = vunpack.c.l.s8.bf16 %v1023
        %v1316 = vunpack.c.l.s8.bf16 %v1024
        %v1317 = vunpack.c.l.s8.bf16 %v1025
        %v1318 = vunpack.c.l.s8.bf16 %v1026
        %v1319 = vunpack.c.h.s8.bf16 %v1023
        %v1320 = vunpack.c.h.s8.bf16 %v1024
        %v1321 = vunpack.c.h.s8.bf16 %v1025
        %v1322 = vunpack.c.h.s8.bf16 %v1026
        %v1323 = vunpack.c.l.s8.bf16 %v1027
        %v1324 = vunpack.c.l.s8.bf16 %v1028
        %v1325 = vunpack.c.l.s8.bf16 %v1029
        %v1326 = vunpack.c.l.s8.bf16 %v1030
        %v1327 = vunpack.c.h.s8.bf16 %v1027
        %v1328 = vunpack.c.h.s8.bf16 %v1028
        %v1329 = vunpack.c.h.s8.bf16 %v1029
        %v1330 = vunpack.c.h.s8.bf16 %v1030
        %v1331 = vunpack.c.l.s8.bf16 %v1031
        %v1332 = vunpack.c.l.s8.bf16 %v1032
        %v1333 = vunpack.c.l.s8.bf16 %v1033
        %v1334 = vunpack.c.l.s8.bf16 %v1034
        %v1335 = vunpack.c.h.s8.bf16 %v1031
        %v1336 = vunpack.c.h.s8.bf16 %v1032
        %v1337 = vunpack.c.h.s8.bf16 %v1033
        %v1338 = vunpack.c.h.s8.bf16 %v1034
        %v1339 = vunpack.c.l.s8.bf16 %v1035
        %v1340 = vunpack.c.l.s8.bf16 %v1036
        %v1341 = vunpack.c.l.s8.bf16 %v1037
        %v1342 = vunpack.c.l.s8.bf16 %v1038
        %v1343 = vunpack.c.h.s8.bf16 %v1035
        %v1344 = vunpack.c.h.s8.bf16 %v1036
        %v1345 = vunpack.c.h.s8.bf16 %v1037
        %v1346 = vunpack.c.h.s8.bf16 %v1038
        %v1347 = vunpack.c.l.s8.bf16 %v1039
        %v1348 = vunpack.c.l.s8.bf16 %v1040
        %v1349 = vunpack.c.l.s8.bf16 %v1041
        %v1350 = vunpack.c.l.s8.bf16 %v1042
        %v1351 = vunpack.c.h.s8.bf16 %v1039
        %v1352 = vunpack.c.h.s8.bf16 %v1040
        %v1353 = vunpack.c.h.s8.bf16 %v1041
        %v1354 = vunpack.c.h.s8.bf16 %v1042
        %v1355 = vunpack.c.l.s8.bf16 %v1043
        %v1356 = vunpack.c.l.s8.bf16 %v1044
        %v1357 = vunpack.c.l.s8.bf16 %v1045
        %v1358 = vunpack.c.l.s8.bf16 %v1046
        %v1359 = vunpack.c.h.s8.bf16 %v1043
        %v1360 = vunpack.c.h.s8.bf16 %v1044
        %v1361 = vunpack.c.h.s8.bf16 %v1045
        %v1362 = vunpack.c.h.s8.bf16 %v1046
        %v1363 = vunpack.c.l.s8.bf16 %v1047
        %v1364 = vunpack.c.l.s8.bf16 %v1048
        %v1365 = vunpack.c.l.s8.bf16 %v1049
        %v1366 = vunpack.c.l.s8.bf16 %v1050
        %v1367 = vunpack.c.h.s8.bf16 %v1047
        %v1368 = vunpack.c.h.s8.bf16 %v1048
        %v1369 = vunpack.c.h.s8.bf16 %v1049
        %v1370 = vunpack.c.h.s8.bf16 %v1050
        %v1371 = vunpack.c.l.s8.bf16 %v1051
        %v1372 = vunpack.c.l.s8.bf16 %v1052
        %v1373 = vunpack.c.l.s8.bf16 %v1053
        %v1374 = vunpack.c.l.s8.bf16 %v1054
        %v1375 = vunpack.c.h.s8.bf16 %v1051
        %v1376 = vunpack.c.h.s8.bf16 %v1052
        %v1377 = vunpack.c.h.s8.bf16 %v1053
        %v1378 = vunpack.c.h.s8.bf16 %v1054
        %v1379 = vunpack.c.l.s8.bf16 %v1055
        %v1380 = vunpack.c.l.s8.bf16 %v1056
        %v1381 = vunpack.c.l.s8.bf16 %v1057
        %v1382 = vunpack.c.l.s8.bf16 %v1058
        %v1383 = vunpack.c.h.s8.bf16 %v1055
        %v1384 = vunpack.c.h.s8.bf16 %v1056
        %v1385 = vunpack.c.h.s8.bf16 %v1057
        %v1386 = vunpack.c.h.s8.bf16 %v1058
        %v1387 = vunpack.c.l.s8.bf16 %v1059
        %v1388 = vunpack.c.l.s8.bf16 %v1060
        %v1389 = vunpack.c.l.s8.bf16 %v1061
        %v1390 = vunpack.c.l.s8.bf16 %v1062
        %v1391 = vunpack.c.h.s8.bf16 %v1059
        %v1392 = vunpack.c.h.s8.bf16 %v1060
        %v1393 = vunpack.c.h.s8.bf16 %v1061
        %v1394 = vunpack.c.h.s8.bf16 %v1062
        %v1395 = vunpack.c.l.s8.bf16 %v1063
        %v1396 = vunpack.c.l.s8.bf16 %v1064
        %v1397 = vunpack.c.l.s8.bf16 %v1065
        %v1398 = vunpack.c.l.s8.bf16 %v1066
        %v1399 = vunpack.c.h.s8.bf16 %v1063
        %v1400 = vunpack.c.h.s8.bf16 %v1064
        %v1401 = vunpack.c.h.s8.bf16 %v1065
        %v1402 = vunpack.c.h.s8.bf16 %v1066
        %v1403 = vunpack.c.l.s8.bf16 %v1067
        %v1404 = vunpack.c.l.s8.bf16 %v1068
        %v1405 = vunpack.c.l.s8.bf16 %v1069
        %v1406 = vunpack.c.l.s8.bf16 %v1070
        %v1407 = vunpack.c.h.s8.bf16 %v1067
        %v1408 = vunpack.c.h.s8.bf16 %v1068
        %v1409 = vunpack.c.h.s8.bf16 %v1069
        %v1410 = vunpack.c.h.s8.bf16 %v1070
        %v1411 = vunpack.c.l.s8.bf16 %v1071
        %v1412 = vunpack.c.l.s8.bf16 %v1072
        %v1413 = vunpack.c.l.s8.bf16 %v1073
        %v1414 = vunpack.c.l.s8.bf16 %v1074
        %v1415 = vunpack.c.h.s8.bf16 %v1071
        %v1416 = vunpack.c.h.s8.bf16 %v1072
        %v1417 = vunpack.c.h.s8.bf16 %v1073
        %v1418 = vunpack.c.h.s8.bf16 %v1074
        %v1419 = vunpack.c.l.s8.bf16 %v1075
        %v1420 = vunpack.c.l.s8.bf16 %v1076
        %v1421 = vunpack.c.l.s8.bf16 %v1077
        %v1422 = vunpack.c.l.s8.bf16 %v1078
        %v1423 = vunpack.c.h.s8.bf16 %v1075
        %v1424 = vunpack.c.h.s8.bf16 %v1076
        %v1425 = vunpack.c.h.s8.bf16 %v1077
        %v1426 = vunpack.c.h.s8.bf16 %v1078
        %v1427 = vunpack.c.l.s8.bf16 %v1079
        %v1428 = vunpack.c.l.s8.bf16 %v1080
        %v1429 = vunpack.c.l.s8.bf16 %v1081
        %v1430 = vunpack.c.l.s8.bf16 %v1082
        %v1431 = vunpack.c.h.s8.bf16 %v1079
        %v1432 = vunpack.c.h.s8.bf16 %v1080
        %v1433 = vunpack.c.h.s8.bf16 %v1081
        %v1434 = vunpack.c.h.s8.bf16 %v1082
        %v1435 = vunpack.c.l.s8.bf16 %v1083
        %v1436 = vunpack.c.l.s8.bf16 %v1084
        %v1437 = vunpack.c.l.s8.bf16 %v1085
        %v1438 = vunpack.c.l.s8.bf16 %v1086
        %v1439 = vunpack.c.h.s8.bf16 %v1083
        %v1440 = vunpack.c.h.s8.bf16 %v1084
        %v1441 = vunpack.c.h.s8.bf16 %v1085
        %v1442 = vunpack.c.h.s8.bf16 %v1086
        %v1443 = vunpack.c.l.s8.bf16 %v1087
        %v1444 = vunpack.c.l.s8.bf16 %v1088
        %v1445 = vunpack.c.l.s8.bf16 %v1089
        %v1446 = vunpack.c.l.s8.bf16 %v1090
        %v1447 = vunpack.c.h.s8.bf16 %v1087
        %v1448 = vunpack.c.h.s8.bf16 %v1088
        %v1449 = vunpack.c.h.s8.bf16 %v1089
        %v1450 = vunpack.c.h.s8.bf16 %v1090
        %v1451 = vunpack.c.l.s8.bf16 %v1091
        %v1452 = vunpack.c.l.s8.bf16 %v1092
        %v1453 = vunpack.c.l.s8.bf16 %v1093
        %v1454 = vunpack.c.l.s8.bf16 %v1094
        %v1455 = vunpack.c.h.s8.bf16 %v1091
        %v1456 = vunpack.c.h.s8.bf16 %v1092
        %v1457 = vunpack.c.h.s8.bf16 %v1093
        %v1458 = vunpack.c.h.s8.bf16 %v1094
        %v1459 = vunpack.c.l.s8.bf16 %v1095
        %v1460 = vunpack.c.l.s8.bf16 %v1096
        %v1461 = vunpack.c.l.s8.bf16 %v1097
        %v1462 = vunpack.c.l.s8.bf16 %v1098
        %v1463 = vunpack.c.h.s8.bf16 %v1095
        %v1464 = vunpack.c.h.s8.bf16 %v1096
        %v1465 = vunpack.c.h.s8.bf16 %v1097
        %v1466 = vunpack.c.h.s8.bf16 %v1098
        %v1467 = vunpack.c.l.s8.bf16 %v1099
        %v1468 = vunpack.c.l.s8.bf16 %v1100
        %v1469 = vunpack.c.l.s8.bf16 %v1101
        %v1470 = vunpack.c.l.s8.bf16 %v1102
        %v1471 = vunpack.c.h.s8.bf16 %v1099
        %v1472 = vunpack.c.h.s8.bf16 %v1100
        %v1473 = vunpack.c.h.s8.bf16 %v1101
        %v1474 = vunpack.c.h.s8.bf16 %v1102
        %v1475 = vunpack.c.l.s8.bf16 %v1103
        %v1476 = vunpack.c.l.s8.bf16 %v1104
        %v1477 = vunpack.c.l.s8.bf16 %v1105
        %v1478 = vunpack.c.l.s8.bf16 %v1106
        %v1479 = vunpack.c.h.s8.bf16 %v1103
        %v1480 = vunpack.c.h.s8.bf16 %v1104
        %v1481 = vunpack.c.h.s8.bf16 %v1105
        %v1482 = vunpack.c.h.s8.bf16 %v1106
        %v1483 = vunpack.c.l.s8.bf16 %v1107
        %v1484 = vunpack.c.l.s8.bf16 %v1108
        %v1485 = vunpack.c.l.s8.bf16 %v1109
        %v1486 = vunpack.c.l.s8.bf16 %v1110
        %v1487 = vunpack.c.h.s8.bf16 %v1107
        %v1488 = vunpack.c.h.s8.bf16 %v1108
        %v1489 = vunpack.c.h.s8.bf16 %v1109
        %v1490 = vunpack.c.h.s8.bf16 %v1110
        %v1491 = vunpack.c.l.s8.bf16 %v1111
        %v1492 = vunpack.c.l.s8.bf16 %v1112
        %v1493 = vunpack.c.l.s8.bf16 %v1113
        %v1494 = vunpack.c.l.s8.bf16 %v1114
        %v1495 = vunpack.c.h.s8.bf16 %v1111
        %v1496 = vunpack.c.h.s8.bf16 %v1112
        %v1497 = vunpack.c.h.s8.bf16 %v1113
        %v1498 = vunpack.c.h.s8.bf16 %v1114
        %v1499 = vunpack.c.l.s8.bf16 %v1115
        %v1500 = vunpack.c.l.s8.bf16 %v1116
        %v1501 = vunpack.c.l.s8.bf16 %v1117
        %v1502 = vunpack.c.l.s8.bf16 %v1118
        %v1503 = vunpack.c.h.s8.bf16 %v1115
        %v1504 = vunpack.c.h.s8.bf16 %v1116
        %v1505 = vunpack.c.h.s8.bf16 %v1117
        %v1506 = vunpack.c.h.s8.bf16 %v1118
        %v1507 = vunpack.c.l.s8.bf16 %v1119
        %v1508 = vunpack.c.l.s8.bf16 %v1120
        %v1509 = vunpack.c.l.s8.bf16 %v1121
        %v1510 = vunpack.c.l.s8.bf16 %v1122
        %v1511 = vunpack.c.h.s8.bf16 %v1119
        %v1512 = vunpack.c.h.s8.bf16 %v1120
        %v1513 = vunpack.c.h.s8.bf16 %v1121
        %v1514 = vunpack.c.h.s8.bf16 %v1122
        %v1515 = vunpack.c.l.s8.bf16 %v1123
        %v1516 = vunpack.c.l.s8.bf16 %v1124
        %v1517 = vunpack.c.l.s8.bf16 %v1125
        %v1518 = vunpack.c.l.s8.bf16 %v1126
        %v1519 = vunpack.c.h.s8.bf16 %v1123
        %v1520 = vunpack.c.h.s8.bf16 %v1124
        %v1521 = vunpack.c.h.s8.bf16 %v1125
        %v1522 = vunpack.c.h.s8.bf16 %v1126
        %v1523 = vunpack.c.l.s8.bf16 %v1127
        %v1524 = vunpack.c.l.s8.bf16 %v1128
        %v1525 = vunpack.c.l.s8.bf16 %v1129
        %v1526 = vunpack.c.l.s8.bf16 %v1130
        %v1527 = vunpack.c.h.s8.bf16 %v1127
        %v1528 = vunpack.c.h.s8.bf16 %v1128
        %v1529 = vunpack.c.h.s8.bf16 %v1129
        %v1530 = vunpack.c.h.s8.bf16 %v1130
        %v1531 = vunpack.c.l.s8.bf16 %v1131
        %v1532 = vunpack.c.l.s8.bf16 %v1132
        %v1533 = vunpack.c.l.s8.bf16 %v1133
        %v1534 = vunpack.c.l.s8.bf16 %v1134
        %v1535 = vunpack.c.h.s8.bf16 %v1131
        %v1536 = vunpack.c.h.s8.bf16 %v1132
        %v1537 = vunpack.c.h.s8.bf16 %v1133
        %v1538 = vunpack.c.h.s8.bf16 %v1134
        %v1539 = vunpack.c.l.s8.bf16 %v1135
        %v1540 = vunpack.c.l.s8.bf16 %v1136
        %v1541 = vunpack.c.l.s8.bf16 %v1137
        %v1542 = vunpack.c.l.s8.bf16 %v1138
        %v1543 = vunpack.c.h.s8.bf16 %v1135
        %v1544 = vunpack.c.h.s8.bf16 %v1136
        %v1545 = vunpack.c.h.s8.bf16 %v1137
        %v1546 = vunpack.c.h.s8.bf16 %v1138
        %v1547 = vunpack.c.l.s8.bf16 %v1139
        %v1548 = vunpack.c.l.s8.bf16 %v1140
        %v1549 = vunpack.c.l.s8.bf16 %v1141
        %v1550 = vunpack.c.l.s8.bf16 %v1142
        %v1551 = vunpack.c.h.s8.bf16 %v1139
        %v1552 = vunpack.c.h.s8.bf16 %v1140
        %v1553 = vunpack.c.h.s8.bf16 %v1141
        %v1554 = vunpack.c.h.s8.bf16 %v1142
        %v1555 = vunpack.c.l.s8.bf16 %v1143
        %v1556 = vunpack.c.l.s8.bf16 %v1144
        %v1557 = vunpack.c.l.s8.bf16 %v1145
        %v1558 = vunpack.c.l.s8.bf16 %v1146
        %v1559 = vunpack.c.h.s8.bf16 %v1143
        %v1560 = vunpack.c.h.s8.bf16 %v1144
        %v1561 = vunpack.c.h.s8.bf16 %v1145
        %v1562 = vunpack.c.h.s8.bf16 %v1146
        %v1563 = vunpack.c.l.s8.bf16 %v1147
        %v1564 = vunpack.c.l.s8.bf16 %v1148
        %v1565 = vunpack.c.l.s8.bf16 %v1149
        %v1566 = vunpack.c.l.s8.bf16 %v1150
        %v1567 = vunpack.c.h.s8.bf16 %v1147
        %v1568 = vunpack.c.h.s8.bf16 %v1148
        %v1569 = vunpack.c.h.s8.bf16 %v1149
        %v1570 = vunpack.c.h.s8.bf16 %v1150
        %v1571 = vunpack.c.l.s8.bf16 %v1151
        %v1572 = vunpack.c.l.s8.bf16 %v1152
        %v1573 = vunpack.c.l.s8.bf16 %v1153
        %v1574 = vunpack.c.l.s8.bf16 %v1154
        %v1575 = vunpack.c.h.s8.bf16 %v1151
        %v1576 = vunpack.c.h.s8.bf16 %v1152
        %v1577 = vunpack.c.h.s8.bf16 %v1153
        %v1578 = vunpack.c.h.s8.bf16 %v1154
        %v1579 = vunpack.c.l.s8.bf16 %v1155
        %v1580 = vunpack.c.l.s8.bf16 %v1156
        %v1581 = vunpack.c.l.s8.bf16 %v1157
        %v1582 = vunpack.c.l.s8.bf16 %v1158
        %v1583 = vunpack.c.h.s8.bf16 %v1155
        %v1584 = vunpack.c.h.s8.bf16 %v1156
        %v1585 = vunpack.c.h.s8.bf16 %v1157
        %v1586 = vunpack.c.h.s8.bf16 %v1158
        %v1587 = vunpack.c.l.s8.bf16 %v1159
        %v1588 = vunpack.c.l.s8.bf16 %v1160
        %v1589 = vunpack.c.l.s8.bf16 %v1161
        %v1590 = vunpack.c.l.s8.bf16 %v1162
        %v1591 = vunpack.c.h.s8.bf16 %v1159
        %v1592 = vunpack.c.h.s8.bf16 %v1160
        %v1593 = vunpack.c.h.s8.bf16 %v1161
        %v1594 = vunpack.c.h.s8.bf16 %v1162
        %v1595 = vunpack.c.l.s8.bf16 %v1163
        %v1596 = vunpack.c.l.s8.bf16 %v1164
        %v1597 = vunpack.c.l.s8.bf16 %v1165
        %v1598 = vunpack.c.l.s8.bf16 %v1166
        %v1599 = vunpack.c.h.s8.bf16 %v1163
        %v1600 = vunpack.c.h.s8.bf16 %v1164
        %v1601 = vunpack.c.h.s8.bf16 %v1165
        %v1602 = vunpack.c.h.s8.bf16 %v1166
        %v1603 = vunpack.c.l.s8.bf16 %v1167
        %v1604 = vunpack.c.l.s8.bf16 %v1168
        %v1605 = vunpack.c.l.s8.bf16 %v1169
        %v1606 = vunpack.c.l.s8.bf16 %v1170
        %v1607 = vunpack.c.h.s8.bf16 %v1167
        %v1608 = vunpack.c.h.s8.bf16 %v1168
        %v1609 = vunpack.c.h.s8.bf16 %v1169
        %v1610 = vunpack.c.h.s8.bf16 %v1170
        %v1611 = vunpack.c.l.s8.bf16 %v1171
        %v1612 = vunpack.c.l.s8.bf16 %v1172
        %v1613 = vunpack.c.l.s8.bf16 %v1173
        %v1614 = vunpack.c.l.s8.bf16 %v1174
        %v1615 = vunpack.c.h.s8.bf16 %v1171
        %v1616 = vunpack.c.h.s8.bf16 %v1172
        %v1617 = vunpack.c.h.s8.bf16 %v1173
        %v1618 = vunpack.c.h.s8.bf16 %v1174
        %v1619 = vunpack.c.l.s8.bf16 %v1175
        %v1620 = vunpack.c.l.s8.bf16 %v1176
        %v1621 = vunpack.c.l.s8.bf16 %v1177
        %v1622 = vunpack.c.l.s8.bf16 %v1178
        %v1623 = vunpack.c.h.s8.bf16 %v1175
        %v1624 = vunpack.c.h.s8.bf16 %v1176
        %v1625 = vunpack.c.h.s8.bf16 %v1177
        %v1626 = vunpack.c.h.s8.bf16 %v1178
        %v1627 = vunpack.c.l.s8.bf16 %v1179
        %v1628 = vunpack.c.l.s8.bf16 %v1180
        %v1629 = vunpack.c.l.s8.bf16 %v1181
        %v1630 = vunpack.c.l.s8.bf16 %v1182
        %v1631 = vunpack.c.h.s8.bf16 %v1179
        %v1632 = vunpack.c.h.s8.bf16 %v1180
        %v1633 = vunpack.c.h.s8.bf16 %v1181
        %v1634 = vunpack.c.h.s8.bf16 %v1182
        %v1635 = vunpack.c.l.s8.bf16 %v1183
        %v1636 = vunpack.c.l.s8.bf16 %v1184
        %v1637 = vunpack.c.l.s8.bf16 %v1185
        %v1638 = vunpack.c.l.s8.bf16 %v1186
        %v1639 = vunpack.c.h.s8.bf16 %v1183
        %v1640 = vunpack.c.h.s8.bf16 %v1184
        %v1641 = vunpack.c.h.s8.bf16 %v1185
        %v1642 = vunpack.c.h.s8.bf16 %v1186
        %v1643 = vunpack.c.l.s8.bf16 %v1187
        %v1644 = vunpack.c.l.s8.bf16 %v1188
        %v1645 = vunpack.c.l.s8.bf16 %v1189
        %v1646 = vunpack.c.l.s8.bf16 %v1190
        %v1647 = vunpack.c.h.s8.bf16 %v1187
        %v1648 = vunpack.c.h.s8.bf16 %v1188
        %v1649 = vunpack.c.h.s8.bf16 %v1189
        %v1650 = vunpack.c.h.s8.bf16 %v1190
        %v1651 = vunpack.c.l.s8.bf16 %v1191
        %v1652 = vunpack.c.l.s8.bf16 %v1192
        %v1653 = vunpack.c.l.s8.bf16 %v1193
        %v1654 = vunpack.c.l.s8.bf16 %v1194
        %v1655 = vunpack.c.h.s8.bf16 %v1191
        %v1656 = vunpack.c.h.s8.bf16 %v1192
        %v1657 = vunpack.c.h.s8.bf16 %v1193
        %v1658 = vunpack.c.h.s8.bf16 %v1194
        %v1659 = vunpack.c.l.s8.bf16 %v1195
        %v1660 = vunpack.c.l.s8.bf16 %v1196
        %v1661 = vunpack.c.l.s8.bf16 %v1197
        %v1662 = vunpack.c.l.s8.bf16 %v1198
        %v1663 = vunpack.c.h.s8.bf16 %v1195
        %v1664 = vunpack.c.h.s8.bf16 %v1196
        %v1665 = vunpack.c.h.s8.bf16 %v1197
        %v1666 = vunpack.c.h.s8.bf16 %v1198
        %v1667 = vunpack.c.l.s8.bf16 %v1199
        %v1668 = vunpack.c.l.s8.bf16 %v1200
        %v1669 = vunpack.c.l.s8.bf16 %v1201
        %v1670 = vunpack.c.l.s8.bf16 %v1202
        %v1671 = vunpack.c.h.s8.bf16 %v1199
        %v1672 = vunpack.c.h.s8.bf16 %v1200
        %v1673 = vunpack.c.h.s8.bf16 %v1201
        %v1674 = vunpack.c.h.s8.bf16 %v1202
        %v1675 = vunpack.c.l.s8.bf16 %v1203
        %v1676 = vunpack.c.l.s8.bf16 %v1204
        %v1677 = vunpack.c.l.s8.bf16 %v1205
        %v1678 = vunpack.c.l.s8.bf16 %v1206
        %v1679 = vunpack.c.h.s8.bf16 %v1203
        %v1680 = vunpack.c.h.s8.bf16 %v1204
        %v1681 = vunpack.c.h.s8.bf16 %v1205
        %v1682 = vunpack.c.h.s8.bf16 %v1206
        %v1683 = vunpack.c.l.s8.bf16 %v1207
        %v1684 = vunpack.c.l.s8.bf16 %v1208
        %v1685 = vunpack.c.l.s8.bf16 %v1209
        %v1686 = vunpack.c.l.s8.bf16 %v1210
        %v1687 = vunpack.c.h.s8.bf16 %v1207
        %v1688 = vunpack.c.h.s8.bf16 %v1208
        %v1689 = vunpack.c.h.s8.bf16 %v1209
        %v1690 = vunpack.c.h.s8.bf16 %v1210
        %v1691 = vunpack.c.l.s8.bf16 %v1211
        %v1692 = vunpack.c.l.s8.bf16 %v1212
        %v1693 = vunpack.c.l.s8.bf16 %v1213
        %v1694 = vunpack.c.l.s8.bf16 %v1214
        %v1695 = vunpack.c.h.s8.bf16 %v1211
        %v1696 = vunpack.c.h.s8.bf16 %v1212
        %v1697 = vunpack.c.h.s8.bf16 %v1213
        %v1698 = vunpack.c.h.s8.bf16 %v1214
        %v1699 = vunpack.c.l.s8.bf16 %v1215
        %v1700 = vunpack.c.l.s8.bf16 %v1216
        %v1701 = vunpack.c.l.s8.bf16 %v1217
        %v1702 = vunpack.c.l.s8.bf16 %v1218
        %v1703 = vunpack.c.h.s8.bf16 %v1215
        %v1704 = vunpack.c.h.s8.bf16 %v1216
        %v1705 = vunpack.c.h.s8.bf16 %v1217
        %v1706 = vunpack.c.h.s8.bf16 %v1218
        %v1707 = vunpack.c.l.s8.bf16 %v1219
        %v1708 = vunpack.c.l.s8.bf16 %v1220
        %v1709 = vunpack.c.l.s8.bf16 %v1221
        %v1710 = vunpack.c.l.s8.bf16 %v1222
        %v1711 = vunpack.c.h.s8.bf16 %v1219
        %v1712 = vunpack.c.h.s8.bf16 %v1220
        %v1713 = vunpack.c.h.s8.bf16 %v1221
        %v1714 = vunpack.c.h.s8.bf16 %v1222
        %v1715 = vunpack.c.l.s8.bf16 %v1223
        %v1716 = vunpack.c.l.s8.bf16 %v1224
        %v1717 = vunpack.c.l.s8.bf16 %v1225
        %v1718 = vunpack.c.l.s8.bf16 %v1226
        %v1719 = vunpack.c.h.s8.bf16 %v1223
        %v1720 = vunpack.c.h.s8.bf16 %v1224
        %v1721 = vunpack.c.h.s8.bf16 %v1225
        %v1722 = vunpack.c.h.s8.bf16 %v1226
        %v1723 = vunpack.c.l.s8.bf16 %v1227
        %v1724 = vunpack.c.l.s8.bf16 %v1228
        %v1725 = vunpack.c.l.s8.bf16 %v1229
        %v1726 = vunpack.c.l.s8.bf16 %v1230
        %v1727 = vunpack.c.h.s8.bf16 %v1227
        %v1728 = vunpack.c.h.s8.bf16 %v1228
        %v1729 = vunpack.c.h.s8.bf16 %v1229
        %v1730 = vunpack.c.h.s8.bf16 %v1230
        %v1731 = vunpack.c.l.s8.bf16 %v1231
        %v1732 = vunpack.c.l.s8.bf16 %v1232
        %v1733 = vunpack.c.l.s8.bf16 %v1233
        %v1734 = vunpack.c.l.s8.bf16 %v1234
        %v1735 = vunpack.c.h.s8.bf16 %v1231
        %v1736 = vunpack.c.h.s8.bf16 %v1232
        %v1737 = vunpack.c.h.s8.bf16 %v1233
        %v1738 = vunpack.c.h.s8.bf16 %v1234
        %v1739 = vunpack.c.l.s8.bf16 %v1235
        %v1740 = vunpack.c.l.s8.bf16 %v1236
        %v1741 = vunpack.c.l.s8.bf16 %v1237
        %v1742 = vunpack.c.l.s8.bf16 %v1238
        %v1743 = vunpack.c.h.s8.bf16 %v1235
        %v1744 = vunpack.c.h.s8.bf16 %v1236
        %v1745 = vunpack.c.h.s8.bf16 %v1237
        %v1746 = vunpack.c.h.s8.bf16 %v1238
        %v1747 = vunpack.c.l.s8.bf16 %v1239
        %v1748 = vunpack.c.l.s8.bf16 %v1240
        %v1749 = vunpack.c.l.s8.bf16 %v1241
        %v1750 = vunpack.c.l.s8.bf16 %v1242
        %v1751 = vunpack.c.h.s8.bf16 %v1239
        %v1752 = vunpack.c.h.s8.bf16 %v1240
        %v1753 = vunpack.c.h.s8.bf16 %v1241
        %v1754 = vunpack.c.h.s8.bf16 %v1242
        %1755 = vmatprep.subr.bf16.mxu0 %v1244
        %1756 = vmatpush1.bf16.msra.mxu0 %v1243
        %1757 = vmatprep.subr.bf16.mxu0 %v1248
        %1758 = vmatpush1.bf16.msra.mxu0 %v1247
        %1759 = vmatprep.subr.bf16.mxu0 %v1252
        %1760 = vmatpush1.bf16.msra.mxu0 %v1251
        %1761 = vmatprep.subr.bf16.mxu0 %v1256
        %1762 = vmatpush1.bf16.msra.mxu0 %v1255
        %1763 = vmatprep.subr.bf16.mxu0 %v1260
        %1764 = vmatpush1.bf16.msra.mxu0 %v1259
        %1765 = vmatprep.subr.bf16.mxu0 %v1264
        %1766 = vmatpush1.bf16.msra.mxu0 %v1263
        %1767 = vmatprep.subr.bf16.mxu0 %v1268
        %1768 = vmatpush1.bf16.msra.mxu0 %v1267
        %1769 = vmatprep.subr.bf16.mxu0 %v1272
        %1770 = vmatpush1.bf16.msra.mxu0 %v1271
        %1771 = vmatprep.subr.bf16.mxu0 %v1276
        %1772 = vmatpush1.bf16.msra.mxu0 %v1275
        %1773 = vmatprep.subr.bf16.mxu0 %v1280
        %1774 = vmatpush1.bf16.msra.mxu0 %v1279
        %1775 = vmatprep.subr.bf16.mxu0 %v1284
        %1776 = vmatpush1.bf16.msra.mxu0 %v1283
        %1777 = vmatprep.subr.bf16.mxu0 %v1288
        %1778 = vmatpush1.bf16.msra.mxu0 %v1287
        %1779 = vmatprep.subr.bf16.mxu0 %v1292
        %1780 = vmatpush1.bf16.msra.mxu0 %v1291
        %1781 = vmatprep.subr.bf16.mxu0 %v1296
        %1782 = vmatpush1.bf16.msra.mxu0 %v1295
        %1783 = vmatprep.subr.bf16.mxu0 %v1300
        %1784 = vmatpush1.bf16.msra.mxu0 %v1299
        %1785 = vmatprep.subr.bf16.mxu0 %v1304
        %1786 = vmatpush1.bf16.msra.mxu0 %v1303
        %1787 = vmatprep.mubr.bf16.mxu0 %v972
        %1788 = vmatmul.mubr.bf16.gmra.mrb[0].mxu0 %v971
        %v1789 = vpop.f32.mrb[0].mxu0
        %v1790 = vadd.f32 0.0, %v1789
        %v1791 = vpop.f32.mrb[0].mxu0
        %v1792 = vadd.f32 0.0, %v1791
        %v1793 = vpop.f32.mrb[0].mxu0
        %v1794 = vpop.f32.mrb[0].mxu0
        %1795 = vdwg.mxu0
        %1796 = vmatprep.subr.bf16.mxu0 %v1308
        %1797 = vmatpush1.bf16.msra.mxu0 %v1307
        %1798 = vmatprep.subr.bf16.mxu0 %v1312
        %1799 = vmatpush1.bf16.msra.mxu0 %v1311
        %1800 = vmatprep.subr.bf16.mxu0 %v1316
        %1801 = vmatpush1.bf16.msra.mxu0 %v1315
        %1802 = vmatprep.subr.bf16.mxu0 %v1320
        %1803 = vmatpush1.bf16.msra.mxu0 %v1319
        %1804 = vmatprep.subr.bf16.mxu0 %v1324
        %1805 = vmatpush1.bf16.msra.mxu0 %v1323
        %1806 = vmatprep.subr.bf16.mxu0 %v1328
        %1807 = vmatpush1.bf16.msra.mxu0 %v1327
        %1808 = vmatprep.subr.bf16.mxu0 %v1332
        %1809 = vmatpush1.bf16.msra.mxu0 %v1331
        %1810 = vmatprep.subr.bf16.mxu0 %v1336
        %1811 = vmatpush1.bf16.msra.mxu0 %v1335
        %1812 = vmatprep.subr.bf16.mxu0 %v1340
        %1813 = vmatpush1.bf16.msra.mxu0 %v1339
        %1814 = vmatprep.subr.bf16.mxu0 %v1344
        %1815 = vmatpush1.bf16.msra.mxu0 %v1343
        %1816 = vmatprep.subr.bf16.mxu0 %v1348
        %1817 = vmatpush1.bf16.msra.mxu0 %v1347
        %1818 = vmatprep.subr.bf16.mxu0 %v1352
        %1819 = vmatpush1.bf16.msra.mxu0 %v1351
        %1820 = vmatprep.subr.bf16.mxu0 %v1356
        %1821 = vmatpush1.bf16.msra.mxu0 %v1355
        %1822 = vmatprep.subr.bf16.mxu0 %v1360
        %1823 = vmatpush1.bf16.msra.mxu0 %v1359
        %1824 = vmatprep.subr.bf16.mxu0 %v1364
        %1825 = vmatpush1.bf16.msra.mxu0 %v1363
        %1826 = vmatprep.subr.bf16.mxu0 %v1368
        %1827 = vmatpush1.bf16.msra.mxu0 %v1367
        %1828 = vmatprep.mubr.bf16.mxu0 %v974
        %1829 = vmatmul.mubr.bf16.gmra.mrb[0].mxu0 %v973
        %v1830 = vpop.f32.mrb[0].mxu0
        %v1831 = vadd.f32 %v1790, %v1830
        %v1832 = vpop.f32.mrb[0].mxu0
        %v1833 = vadd.f32 %v1792, %v1832
        %v1834 = vpop.f32.mrb[0].mxu0
        %v1835 = vpop.f32.mrb[0].mxu0
        %1836 = vdwg.mxu0
        %1837 = vmatprep.subr.bf16.mxu0 %v1372
        %1838 = vmatpush1.bf16.msra.mxu0 %v1371
        %1839 = vmatprep.subr.bf16.mxu0 %v1376
        %1840 = vmatpush1.bf16.msra.mxu0 %v1375
        %1841 = vmatprep.subr.bf16.mxu0 %v1380
        %1842 = vmatpush1.bf16.msra.mxu0 %v1379
        %1843 = vmatprep.subr.bf16.mxu0 %v1384
        %1844 = vmatpush1.bf16.msra.mxu0 %v1383
        %1845 = vmatprep.subr.bf16.mxu0 %v1388
        %1846 = vmatpush1.bf16.msra.mxu0 %v1387
        %1847 = vmatprep.subr.bf16.mxu0 %v1392
        %1848 = vmatpush1.bf16.msra.mxu0 %v1391
        %1849 = vmatprep.subr.bf16.mxu0 %v1396
        %1850 = vmatpush1.bf16.msra.mxu0 %v1395
        %1851 = vmatprep.subr.bf16.mxu0 %v1400
        %1852 = vmatpush1.bf16.msra.mxu0 %v1399
        %1853 = vmatprep.subr.bf16.mxu0 %v1404
        %1854 = vmatpush1.bf16.msra.mxu0 %v1403
        %1855 = vmatprep.subr.bf16.mxu0 %v1408
        %1856 = vmatpush1.bf16.msra.mxu0 %v1407
        %1857 = vmatprep.subr.bf16.mxu0 %v1412
        %1858 = vmatpush1.bf16.msra.mxu0 %v1411
        %1859 = vmatprep.subr.bf16.mxu0 %v1416
        %1860 = vmatpush1.bf16.msra.mxu0 %v1415
        %1861 = vmatprep.subr.bf16.mxu0 %v1420
        %1862 = vmatpush1.bf16.msra.mxu0 %v1419
        %1863 = vmatprep.subr.bf16.mxu0 %v1424
        %1864 = vmatpush1.bf16.msra.mxu0 %v1423
        %1865 = vmatprep.subr.bf16.mxu0 %v1428
        %1866 = vmatpush1.bf16.msra.mxu0 %v1427
        %1867 = vmatprep.subr.bf16.mxu0 %v1432
        %1868 = vmatpush1.bf16.msra.mxu0 %v1431
        %1869 = vmatprep.mubr.bf16.mxu0 %v976
        %1870 = vmatmul.mubr.bf16.gmra.mrb[0].mxu0 %v975
        %v1871 = vpop.f32.mrb[0].mxu0
        %v1872 = vadd.f32 %v1831, %v1871
        %v1873 = vpop.f32.mrb[0].mxu0
        %v1874 = vadd.f32 %v1833, %v1873
        %v1875 = vpop.f32.mrb[0].mxu0
        %v1876 = vpop.f32.mrb[0].mxu0
        %1877 = vdwg.mxu0
        %1878 = vmatprep.subr.bf16.mxu0 %v1436
        %1879 = vmatpush1.bf16.msra.mxu0 %v1435
        %1880 = vmatprep.subr.bf16.mxu0 %v1440
        %1881 = vmatpush1.bf16.msra.mxu0 %v1439
        %1882 = vmatprep.subr.bf16.mxu0 %v1444
        %1883 = vmatpush1.bf16.msra.mxu0 %v1443
        %1884 = vmatprep.subr.bf16.mxu0 %v1448
        %1885 = vmatpush1.bf16.msra.mxu0 %v1447
        %1886 = vmatprep.subr.bf16.mxu0 %v1452
        %1887 = vmatpush1.bf16.msra.mxu0 %v1451
        %1888 = vmatprep.subr.bf16.mxu0 %v1456
        %1889 = vmatpush1.bf16.msra.mxu0 %v1455
        %1890 = vmatprep.subr.bf16.mxu0 %v1460
        %1891 = vmatpush1.bf16.msra.mxu0 %v1459
        %1892 = vmatprep.subr.bf16.mxu0 %v1464
        %1893 = vmatpush1.bf16.msra.mxu0 %v1463
        %1894 = vmatprep.subr.bf16.mxu0 %v1468
        %1895 = vmatpush1.bf16.msra.mxu0 %v1467
        %1896 = vmatprep.subr.bf16.mxu0 %v1472
        %1897 = vmatpush1.bf16.msra.mxu0 %v1471
        %1898 = vmatprep.subr.bf16.mxu0 %v1476
        %1899 = vmatpush1.bf16.msra.mxu0 %v1475
        %1900 = vmatprep.subr.bf16.mxu0 %v1480
        %1901 = vmatpush1.bf16.msra.mxu0 %v1479
        %1902 = vmatprep.subr.bf16.mxu0 %v1484
        %1903 = vmatpush1.bf16.msra.mxu0 %v1483
        %1904 = vmatprep.subr.bf16.mxu0 %v1488
        %1905 = vmatpush1.bf16.msra.mxu0 %v1487
        %1906 = vmatprep.subr.bf16.mxu0 %v1492
        %1907 = vmatpush1.bf16.msra.mxu0 %v1491
        %1908 = vmatprep.subr.bf16.mxu0 %v1496
        %1909 = vmatpush1.bf16.msra.mxu0 %v1495
        %1910 = vmatprep.mubr.bf16.mxu0 %v978
        %1911 = vmatmul.mubr.bf16.gmra.mrb[0].mxu0 %v977
        %v1912 = vpop.f32.mrb[0].mxu0
        %v1913 = vadd.f32 %v1872, %v1912
        %v1914 = vpop.f32.mrb[0].mxu0
        %v1915 = vadd.f32 %v1874, %v1914
        %v1916 = vpop.f32.mrb[0].mxu0
        %v1917 = vpop.f32.mrb[0].mxu0
        %1918 = vdwg.mxu0
        %1919 = vmatprep.subr.bf16.mxu0 %v1500
        %1920 = vmatpush1.bf16.msra.mxu0 %v1499
        %1921 = vmatprep.subr.bf16.mxu0 %v1504
        %1922 = vmatpush1.bf16.msra.mxu0 %v1503
        %1923 = vmatprep.subr.bf16.mxu0 %v1508
        %1924 = vmatpush1.bf16.msra.mxu0 %v1507
        %1925 = vmatprep.subr.bf16.mxu0 %v1512
        %1926 = vmatpush1.bf16.msra.mxu0 %v1511
        %1927 = vmatprep.subr.bf16.mxu0 %v1516
        %1928 = vmatpush1.bf16.msra.mxu0 %v1515
        %1929 = vmatprep.subr.bf16.mxu0 %v1520
        %1930 = vmatpush1.bf16.msra.mxu0 %v1519
        %1931 = vmatprep.subr.bf16.mxu0 %v1524
        %1932 = vmatpush1.bf16.msra.mxu0 %v1523
        %1933 = vmatprep.subr.bf16.mxu0 %v1528
        %1934 = vmatpush1.bf16.msra.mxu0 %v1527
        %1935 = vmatprep.subr.bf16.mxu0 %v1532
        %1936 = vmatpush1.bf16.msra.mxu0 %v1531
        %1937 = vmatprep.subr.bf16.mxu0 %v1536
        %1938 = vmatpush1.bf16.msra.mxu0 %v1535
        %1939 = vmatprep.subr.bf16.mxu0 %v1540
        %1940 = vmatpush1.bf16.msra.mxu0 %v1539
        %1941 = vmatprep.subr.bf16.mxu0 %v1544
        %1942 = vmatpush1.bf16.msra.mxu0 %v1543
        %1943 = vmatprep.subr.bf16.mxu0 %v1548
        %1944 = vmatpush1.bf16.msra.mxu0 %v1547
        %1945 = vmatprep.subr.bf16.mxu0 %v1552
        %1946 = vmatpush1.bf16.msra.mxu0 %v1551
        %1947 = vmatprep.subr.bf16.mxu0 %v1556
        %1948 = vmatpush1.bf16.msra.mxu0 %v1555
        %1949 = vmatprep.subr.bf16.mxu0 %v1560
        %1950 = vmatpush1.bf16.msra.mxu0 %v1559
        %1951 = vmatprep.mubr.bf16.mxu0 %v980
        %1952 = vmatmul.mubr.bf16.gmra.mrb[0].mxu0 %v979
        %v1953 = vpop.f32.mrb[0].mxu0
        %v1954 = vadd.f32 %v1913, %v1953
        %v1955 = vpop.f32.mrb[0].mxu0
        %v1956 = vadd.f32 %v1915, %v1955
        %v1957 = vpop.f32.mrb[0].mxu0
        %v1958 = vpop.f32.mrb[0].mxu0
        %1959 = vdwg.mxu0
        %1960 = vmatprep.subr.bf16.mxu0 %v1564
        %1961 = vmatpush1.bf16.msra.mxu0 %v1563
        %1962 = vmatprep.subr.bf16.mxu0 %v1568
        %1963 = vmatpush1.bf16.msra.mxu0 %v1567
        %1964 = vmatprep.subr.bf16.mxu0 %v1572
        %1965 = vmatpush1.bf16.msra.mxu0 %v1571
        %1966 = vmatprep.subr.bf16.mxu0 %v1576
        %1967 = vmatpush1.bf16.msra.mxu0 %v1575
        %1968 = vmatprep.subr.bf16.mxu0 %v1580
        %1969 = vmatpush1.bf16.msra.mxu0 %v1579
        %1970 = vmatprep.subr.bf16.mxu0 %v1584
        %1971 = vmatpush1.bf16.msra.mxu0 %v1583
        %1972 = vmatprep.subr.bf16.mxu0 %v1588
        %1973 = vmatpush1.bf16.msra.mxu0 %v1587
        %1974 = vmatprep.subr.bf16.mxu0 %v1592
        %1975 = vmatpush1.bf16.msra.mxu0 %v1591
        %1976 = vmatprep.subr.bf16.mxu0 %v1596
        %1977 = vmatpush1.bf16.msra.mxu0 %v1595
        %1978 = vmatprep.subr.bf16.mxu0 %v1600
        %1979 = vmatpush1.bf16.msra.mxu0 %v1599
        %1980 = vmatprep.subr.bf16.mxu0 %v1604
        %1981 = vmatpush1.bf16.msra.mxu0 %v1603
        %1982 = vmatprep.subr.bf16.mxu0 %v1608
        %1983 = vmatpush1.bf16.msra.mxu0 %v1607
        %1984 = vmatprep.subr.bf16.mxu0 %v1612
        %1985 = vmatpush1.bf16.msra.mxu0 %v1611
        %1986 = vmatprep.subr.bf16.mxu0 %v1616
        %1987 = vmatpush1.bf16.msra.mxu0 %v1615
        %1988 = vmatprep.subr.bf16.mxu0 %v1620
        %1989 = vmatpush1.bf16.msra.mxu0 %v1619
        %1990 = vmatprep.subr.bf16.mxu0 %v1624
        %1991 = vmatpush1.bf16.msra.mxu0 %v1623
        %1992 = vmatprep.mubr.bf16.mxu0 %v982
        %1993 = vmatmul.mubr.bf16.gmra.mrb[0].mxu0 %v981
        %v1994 = vpop.f32.mrb[0].mxu0
        %v1995 = vadd.f32 %v1954, %v1994
        %v1996 = vpop.f32.mrb[0].mxu0
        %v1997 = vadd.f32 %v1956, %v1996
        %v1998 = vpop.f32.mrb[0].mxu0
        %v1999 = vpop.f32.mrb[0].mxu0
        %2000 = vdwg.mxu0
        %2001 = vmatprep.subr.bf16.mxu0 %v1628
        %2002 = vmatpush1.bf16.msra.mxu0 %v1627
        %2003 = vmatprep.subr.bf16.mxu0 %v1632
        %2004 = vmatpush1.bf16.msra.mxu0 %v1631
        %2005 = vmatprep.subr.bf16.mxu0 %v1636
        %2006 = vmatpush1.bf16.msra.mxu0 %v1635
        %2007 = vmatprep.subr.bf16.mxu0 %v1640
        %2008 = vmatpush1.bf16.msra.mxu0 %v1639
        %2009 = vmatprep.subr.bf16.mxu0 %v1644
        %2010 = vmatpush1.bf16.msra.mxu0 %v1643
        %2011 = vmatprep.subr.bf16.mxu0 %v1648
        %2012 = vmatpush1.bf16.msra.mxu0 %v1647
        %2013 = vmatprep.subr.bf16.mxu0 %v1652
        %2014 = vmatpush1.bf16.msra.mxu0 %v1651
        %2015 = vmatprep.subr.bf16.mxu0 %v1656
        %2016 = vmatpush1.bf16.msra.mxu0 %v1655
        %2017 = vmatprep.subr.bf16.mxu0 %v1660
        %2018 = vmatpush1.bf16.msra.mxu0 %v1659
        %2019 = vmatprep.subr.bf16.mxu0 %v1664
        %2020 = vmatpush1.bf16.msra.mxu0 %v1663
        %2021 = vmatprep.subr.bf16.mxu0 %v1668
        %2022 = vmatpush1.bf16.msra.mxu0 %v1667
        %2023 = vmatprep.subr.bf16.mxu0 %v1672
        %2024 = vmatpush1.bf16.msra.mxu0 %v1671
        %2025 = vmatprep.subr.bf16.mxu0 %v1676
        %2026 = vmatpush1.bf16.msra.mxu0 %v1675
        %2027 = vmatprep.subr.bf16.mxu0 %v1680
        %2028 = vmatpush1.bf16.msra.mxu0 %v1679
        %2029 = vmatprep.subr.bf16.mxu0 %v1684
        %2030 = vmatpush1.bf16.msra.mxu0 %v1683
        %2031 = vmatprep.subr.bf16.mxu0 %v1688
        %2032 = vmatpush1.bf16.msra.mxu0 %v1687
        %2033 = vmatprep.mubr.bf16.mxu0 %v984
        %2034 = vmatmul.mubr.bf16.gmra.mrb[0].mxu0 %v983
        %v2035 = vpop.f32.mrb[0].mxu0
        %v2036 = vadd.f32 %v1995, %v2035
        %v2037 = vpop.f32.mrb[0].mxu0
        %v2038 = vadd.f32 %v1997, %v2037
        %v2039 = vpop.f32.mrb[0].mxu0
        %v2040 = vpop.f32.mrb[0].mxu0
        %2041 = vdwg.mxu0
        %2042 = vmatprep.subr.bf16.mxu0 %v1692
        %2043 = vmatpush1.bf16.msra.mxu0 %v1691
        %2044 = vmatprep.subr.bf16.mxu0 %v1696
        %2045 = vmatpush1.bf16.msra.mxu0 %v1695
        %2046 = vmatprep.subr.bf16.mxu0 %v1700
        %2047 = vmatpush1.bf16.msra.mxu0 %v1699
        %2048 = vmatprep.subr.bf16.mxu0 %v1704
        %2049 = vmatpush1.bf16.msra.mxu0 %v1703
        %2050 = vmatprep.subr.bf16.mxu0 %v1708
        %2051 = vmatpush1.bf16.msra.mxu0 %v1707
        %2052 = vmatprep.subr.bf16.mxu0 %v1712
        %2053 = vmatpush1.bf16.msra.mxu0 %v1711
        %2054 = vmatprep.subr.bf16.mxu0 %v1716
        %2055 = vmatpush1.bf16.msra.mxu0 %v1715
        %2056 = vmatprep.subr.bf16.mxu0 %v1720
        %2057 = vmatpush1.bf16.msra.mxu0 %v1719
        %2058 = vmatprep.subr.bf16.mxu0 %v1724
        %2059 = vmatpush1.bf16.msra.mxu0 %v1723
        %2060 = vmatprep.subr.bf16.mxu0 %v1728
        %2061 = vmatpush1.bf16.msra.mxu0 %v1727
        %2062 = vmatprep.subr.bf16.mxu0 %v1732
        %2063 = vmatpush1.bf16.msra.mxu0 %v1731
        %2064 = vmatprep.subr.bf16.mxu0 %v1736
        %2065 = vmatpush1.bf16.msra.mxu0 %v1735
        %2066 = vmatprep.subr.bf16.mxu0 %v1740
        %2067 = vmatpush1.bf16.msra.mxu0 %v1739
        %2068 = vmatprep.subr.bf16.mxu0 %v1744
        %2069 = vmatpush1.bf16.msra.mxu0 %v1743
        %2070 = vmatprep.subr.bf16.mxu0 %v1748
        %2071 = vmatpush1.bf16.msra.mxu0 %v1747
        %2072 = vmatprep.subr.bf16.mxu0 %v1752
        %2073 = vmatpush1.bf16.msra.mxu0 %v1751
        %2074 = vmatprep.mubr.bf16.mxu0 %v986
        %2075 = vmatmul.mubr.bf16.gmra.mrb[0].mxu0 %v985
        %v2076 = vpop.f32.mrb[0].mxu0
        %v2077 = vadd.f32 %v2036, %v2076
        %v2078 = vpop.f32.mrb[0].mxu0
        %v2079 = vadd.f32 %v2038, %v2078
        %v2080 = vpop.f32.mrb[0].mxu0
        %v2081 = vpop.f32.mrb[0].mxu0
        %2082 = vdwg.mxu0
        %2083 = vmatprep.subr.bf16.mxu0 %v1246
        %2084 = vmatpush1.bf16.msra.mxu0 %v1245
        %2085 = vmatprep.subr.bf16.mxu0 %v1250
        %2086 = vmatpush1.bf16.msra.mxu0 %v1249
        %2087 = vmatprep.subr.bf16.mxu0 %v1254
        %2088 = vmatpush1.bf16.msra.mxu0 %v1253
        %2089 = vmatprep.subr.bf16.mxu0 %v1258
        %2090 = vmatpush1.bf16.msra.mxu0 %v1257
        %2091 = vmatprep.subr.bf16.mxu0 %v1262
        %2092 = vmatpush1.bf16.msra.mxu0 %v1261
        %2093 = vmatprep.subr.bf16.mxu0 %v1266
        %2094 = vmatpush1.bf16.msra.mxu0 %v1265
        %2095 = vmatprep.subr.bf16.mxu0 %v1270
        %2096 = vmatpush1.bf16.msra.mxu0 %v1269
        %2097 = vmatprep.subr.bf16.mxu0 %v1274
        %2098 = vmatpush1.bf16.msra.mxu0 %v1273
        %2099 = vmatprep.subr.bf16.mxu0 %v1278
        %2100 = vmatpush1.bf16.msra.mxu0 %v1277
        %2101 = vmatprep.subr.bf16.mxu0 %v1282
        %2102 = vmatpush1.bf16.msra.mxu0 %v1281
        %2103 = vmatprep.subr.bf16.mxu0 %v1286
        %2104 = vmatpush1.bf16.msra.mxu0 %v1285
        %2105 = vmatprep.subr.bf16.mxu0 %v1290
        %2106 = vmatpush1.bf16.msra.mxu0 %v1289
        %2107 = vmatprep.subr.bf16.mxu0 %v1294
        %2108 = vmatpush1.bf16.msra.mxu0 %v1293
        %2109 = vmatprep.subr.bf16.mxu0 %v1298
        %2110 = vmatpush1.bf16.msra.mxu0 %v1297
        %2111 = vmatprep.subr.bf16.mxu0 %v1302
        %2112 = vmatpush1.bf16.msra.mxu0 %v1301
        %2113 = vmatprep.subr.bf16.mxu0 %v1306
        %2114 = vmatpush1.bf16.msra.mxu0 %v1305
        %2115 = vmatprep.mubr.bf16.mxu0 %v972
        %2116 = vmatmul.mubr.bf16.gmra.mrb[0].mxu0 %v971
        %v2117 = vpop.f32.mrb[0].mxu0
        %v2118 = vadd.f32 0.0, %v2117
        %v2119 = vpop.f32.mrb[0].mxu0
        %v2120 = vadd.f32 0.0, %v2119
        %v2121 = vpop.f32.mrb[0].mxu0
        %v2122 = vpop.f32.mrb[0].mxu0
        %2123 = vdwg.mxu0
        %2124 = vmatprep.subr.bf16.mxu0 %v1310
        %2125 = vmatpush1.bf16.msra.mxu0 %v1309
        %2126 = vmatprep.subr.bf16.mxu0 %v1314
        %2127 = vmatpush1.bf16.msra.mxu0 %v1313
        %2128 = vmatprep.subr.bf16.mxu0 %v1318
        %2129 = vmatpush1.bf16.msra.mxu0 %v1317
        %2130 = vmatprep.subr.bf16.mxu0 %v1322
        %2131 = vmatpush1.bf16.msra.mxu0 %v1321
        %2132 = vmatprep.subr.bf16.mxu0 %v1326
        %2133 = vmatpush1.bf16.msra.mxu0 %v1325
        %2134 = vmatprep.subr.bf16.mxu0 %v1330
        %2135 = vmatpush1.bf16.msra.mxu0 %v1329
        %2136 = vmatprep.subr.bf16.mxu0 %v1334
        %2137 = vmatpush1.bf16.msra.mxu0 %v1333
        %2138 = vmatprep.subr.bf16.mxu0 %v1338
        %2139 = vmatpush1.bf16.msra.mxu0 %v1337
        %2140 = vmatprep.subr.bf16.mxu0 %v1342
        %2141 = vmatpush1.bf16.msra.mxu0 %v1341
        %2142 = vmatprep.subr.bf16.mxu0 %v1346
        %2143 = vmatpush1.bf16.msra.mxu0 %v1345
        %2144 = vmatprep.subr.bf16.mxu0 %v1350
        %2145 = vmatpush1.bf16.msra.mxu0 %v1349
        %2146 = vmatprep.subr.bf16.mxu0 %v1354
        %2147 = vmatpush1.bf16.msra.mxu0 %v1353
        %2148 = vmatprep.subr.bf16.mxu0 %v1358
        %2149 = vmatpush1.bf16.msra.mxu0 %v1357
        %2150 = vmatprep.subr.bf16.mxu0 %v1362
        %2151 = vmatpush1.bf16.msra.mxu0 %v1361
        %2152 = vmatprep.subr.bf16.mxu0 %v1366
        %2153 = vmatpush1.bf16.msra.mxu0 %v1365
        %2154 = vmatprep.subr.bf16.mxu0 %v1370
        %2155 = vmatpush1.bf16.msra.mxu0 %v1369
        %2156 = vmatprep.mubr.bf16.mxu0 %v974
        %2157 = vmatmul.mubr.bf16.gmra.mrb[0].mxu0 %v973
        %v2158 = vpop.f32.mrb[0].mxu0
        %v2159 = vadd.f32 %v2118, %v2158
        %v2160 = vpop.f32.mrb[0].mxu0
        %v2161 = vadd.f32 %v2120, %v2160
        %v2162 = vpop.f32.mrb[0].mxu0
        %v2163 = vpop.f32.mrb[0].mxu0
        %2164 = vdwg.mxu0
        %2165 = vmatprep.subr.bf16.mxu0 %v1374
        %2166 = vmatpush1.bf16.msra.mxu0 %v1373
        %2167 = vmatprep.subr.bf16.mxu0 %v1378
        %2168 = vmatpush1.bf16.msra.mxu0 %v1377
        %2169 = vmatprep.subr.bf16.mxu0 %v1382
        %2170 = vmatpush1.bf16.msra.mxu0 %v1381
        %2171 = vmatprep.subr.bf16.mxu0 %v1386
        %2172 = vmatpush1.bf16.msra.mxu0 %v1385
        %2173 = vmatprep.subr.bf16.mxu0 %v1390
        %2174 = vmatpush1.bf16.msra.mxu0 %v1389
        %2175 = vmatprep.subr.bf16.mxu0 %v1394
        %2176 = vmatpush1.bf16.msra.mxu0 %v1393
        %2177 = vmatprep.subr.bf16.mxu0 %v1398
        %2178 = vmatpush1.bf16.msra.mxu0 %v1397
        %2179 = vmatprep.subr.bf16.mxu0 %v1402
        %2180 = vmatpush1.bf16.msra.mxu0 %v1401
        %2181 = vmatprep.subr.bf16.mxu0 %v1406
        %2182 = vmatpush1.bf16.msra.mxu0 %v1405
        %2183 = vmatprep.subr.bf16.mxu0 %v1410
        %2184 = vmatpush1.bf16.msra.mxu0 %v1409
        %2185 = vmatprep.subr.bf16.mxu0 %v1414
        %2186 = vmatpush1.bf16.msra.mxu0 %v1413
        %2187 = vmatprep.subr.bf16.mxu0 %v1418
        %2188 = vmatpush1.bf16.msra.mxu0 %v1417
        %2189 = vmatprep.subr.bf16.mxu0 %v1422
        %2190 = vmatpush1.bf16.msra.mxu0 %v1421
        %2191 = vmatprep.subr.bf16.mxu0 %v1426
        %2192 = vmatpush1.bf16.msra.mxu0 %v1425
        %2193 = vmatprep.subr.bf16.mxu0 %v1430
        %2194 = vmatpush1.bf16.msra.mxu0 %v1429
        %2195 = vmatprep.subr.bf16.mxu0 %v1434
        %2196 = vmatpush1.bf16.msra.mxu0 %v1433
        %2197 = vmatprep.mubr.bf16.mxu0 %v976
        %2198 = vmatmul.mubr.bf16.gmra.mrb[0].mxu0 %v975
        %v2199 = vpop.f32.mrb[0].mxu0
        %v2200 = vadd.f32 %v2159, %v2199
        %v2201 = vpop.f32.mrb[0].mxu0
        %v2202 = vadd.f32 %v2161, %v2201
        %v2203 = vpop.f32.mrb[0].mxu0
        %v2204 = vpop.f32.mrb[0].mxu0
        %2205 = vdwg.mxu0
        %2206 = vmatprep.subr.bf16.mxu0 %v1438
        %2207 = vmatpush1.bf16.msra.mxu0 %v1437
        %2208 = vmatprep.subr.bf16.mxu0 %v1442
        %2209 = vmatpush1.bf16.msra.mxu0 %v1441
        %2210 = vmatprep.subr.bf16.mxu0 %v1446
        %2211 = vmatpush1.bf16.msra.mxu0 %v1445
        %2212 = vmatprep.subr.bf16.mxu0 %v1450
        %2213 = vmatpush1.bf16.msra.mxu0 %v1449
        %2214 = vmatprep.subr.bf16.mxu0 %v1454
        %2215 = vmatpush1.bf16.msra.mxu0 %v1453
        %2216 = vmatprep.subr.bf16.mxu0 %v1458
        %2217 = vmatpush1.bf16.msra.mxu0 %v1457
        %2218 = vmatprep.subr.bf16.mxu0 %v1462
        %2219 = vmatpush1.bf16.msra.mxu0 %v1461
        %2220 = vmatprep.subr.bf16.mxu0 %v1466
        %2221 = vmatpush1.bf16.msra.mxu0 %v1465
        %2222 = vmatprep.subr.bf16.mxu0 %v1470
        %2223 = vmatpush1.bf16.msra.mxu0 %v1469
        %2224 = vmatprep.subr.bf16.mxu0 %v1474
        %2225 = vmatpush1.bf16.msra.mxu0 %v1473
        %2226 = vmatprep.subr.bf16.mxu0 %v1478
        %2227 = vmatpush1.bf16.msra.mxu0 %v1477
        %2228 = vmatprep.subr.bf16.mxu0 %v1482
        %2229 = vmatpush1.bf16.msra.mxu0 %v1481
        %2230 = vmatprep.subr.bf16.mxu0 %v1486
        %2231 = vmatpush1.bf16.msra.mxu0 %v1485
        %2232 = vmatprep.subr.bf16.mxu0 %v1490
        %2233 = vmatpush1.bf16.msra.mxu0 %v1489
        %2234 = vmatprep.subr.bf16.mxu0 %v1494
        %2235 = vmatpush1.bf16.msra.mxu0 %v1493
        %2236 = vmatprep.subr.bf16.mxu0 %v1498
        %2237 = vmatpush1.bf16.msra.mxu0 %v1497
        %2238 = vmatprep.mubr.bf16.mxu0 %v978
        %2239 = vmatmul.mubr.bf16.gmra.mrb[0].mxu0 %v977
        %v2240 = vpop.f32.mrb[0].mxu0
        %v2241 = vadd.f32 %v2200, %v2240
        %v2242 = vpop.f32.mrb[0].mxu0
        %v2243 = vadd.f32 %v2202, %v2242
        %v2244 = vpop.f32.mrb[0].mxu0
        %v2245 = vpop.f32.mrb[0].mxu0
        %2246 = vdwg.mxu0
        %2247 = vmatprep.subr.bf16.mxu0 %v1502
        %2248 = vmatpush1.bf16.msra.mxu0 %v1501
        %2249 = vmatprep.subr.bf16.mxu0 %v1506
        %2250 = vmatpush1.bf16.msra.mxu0 %v1505
        %2251 = vmatprep.subr.bf16.mxu0 %v1510
        %2252 = vmatpush1.bf16.msra.mxu0 %v1509
        %2253 = vmatprep.subr.bf16.mxu0 %v1514
        %2254 = vmatpush1.bf16.msra.mxu0 %v1513
        %2255 = vmatprep.subr.bf16.mxu0 %v1518
        %2256 = vmatpush1.bf16.msra.mxu0 %v1517
        %2257 = vmatprep.subr.bf16.mxu0 %v1522
        %2258 = vmatpush1.bf16.msra.mxu0 %v1521
        %2259 = vmatprep.subr.bf16.mxu0 %v1526
        %2260 = vmatpush1.bf16.msra.mxu0 %v1525
        %2261 = vmatprep.subr.bf16.mxu0 %v1530
        %2262 = vmatpush1.bf16.msra.mxu0 %v1529
        %2263 = vmatprep.subr.bf16.mxu0 %v1534
        %2264 = vmatpush1.bf16.msra.mxu0 %v1533
        %2265 = vmatprep.subr.bf16.mxu0 %v1538
        %2266 = vmatpush1.bf16.msra.mxu0 %v1537
        %2267 = vmatprep.subr.bf16.mxu0 %v1542
        %2268 = vmatpush1.bf16.msra.mxu0 %v1541
        %2269 = vmatprep.subr.bf16.mxu0 %v1546
        %2270 = vmatpush1.bf16.msra.mxu0 %v1545
        %2271 = vmatprep.subr.bf16.mxu0 %v1550
        %2272 = vmatpush1.bf16.msra.mxu0 %v1549
        %2273 = vmatprep.subr.bf16.mxu0 %v1554
        %2274 = vmatpush1.bf16.msra.mxu0 %v1553
        %2275 = vmatprep.subr.bf16.mxu0 %v1558
        %2276 = vmatpush1.bf16.msra.mxu0 %v1557
        %2277 = vmatprep.subr.bf16.mxu0 %v1562
        %2278 = vmatpush1.bf16.msra.mxu0 %v1561
        %2279 = vmatprep.mubr.bf16.mxu0 %v980
        %2280 = vmatmul.mubr.bf16.gmra.mrb[0].mxu0 %v979
        %v2281 = vpop.f32.mrb[0].mxu0
        %v2282 = vadd.f32 %v2241, %v2281
        %v2283 = vpop.f32.mrb[0].mxu0
        %v2284 = vadd.f32 %v2243, %v2283
        %v2285 = vpop.f32.mrb[0].mxu0
        %v2286 = vpop.f32.mrb[0].mxu0
        %2287 = vdwg.mxu0
        %2288 = vmatprep.subr.bf16.mxu0 %v1566
        %2289 = vmatpush1.bf16.msra.mxu0 %v1565
        %2290 = vmatprep.subr.bf16.mxu0 %v1570
        %2291 = vmatpush1.bf16.msra.mxu0 %v1569
        %2292 = vmatprep.subr.bf16.mxu0 %v1574
        %2293 = vmatpush1.bf16.msra.mxu0 %v1573
        %2294 = vmatprep.subr.bf16.mxu0 %v1578
        %2295 = vmatpush1.bf16.msra.mxu0 %v1577
        %2296 = vmatprep.subr.bf16.mxu0 %v1582
        %2297 = vmatpush1.bf16.msra.mxu0 %v1581
        %2298 = vmatprep.subr.bf16.mxu0 %v1586
        %2299 = vmatpush1.bf16.msra.mxu0 %v1585
        %2300 = vmatprep.subr.bf16.mxu0 %v1590
        %2301 = vmatpush1.bf16.msra.mxu0 %v1589
        %2302 = vmatprep.subr.bf16.mxu0 %v1594
        %2303 = vmatpush1.bf16.msra.mxu0 %v1593
        %2304 = vmatprep.subr.bf16.mxu0 %v1598
        %2305 = vmatpush1.bf16.msra.mxu0 %v1597
        %2306 = vmatprep.subr.bf16.mxu0 %v1602
        %2307 = vmatpush1.bf16.msra.mxu0 %v1601
        %2308 = vmatprep.subr.bf16.mxu0 %v1606
        %2309 = vmatpush1.bf16.msra.mxu0 %v1605
        %2310 = vmatprep.subr.bf16.mxu0 %v1610
        %2311 = vmatpush1.bf16.msra.mxu0 %v1609
        %2312 = vmatprep.subr.bf16.mxu0 %v1614
        %2313 = vmatpush1.bf16.msra.mxu0 %v1613
        %2314 = vmatprep.subr.bf16.mxu0 %v1618
        %2315 = vmatpush1.bf16.msra.mxu0 %v1617
        %2316 = vmatprep.subr.bf16.mxu0 %v1622
        %2317 = vmatpush1.bf16.msra.mxu0 %v1621
        %2318 = vmatprep.subr.bf16.mxu0 %v1626
        %2319 = vmatpush1.bf16.msra.mxu0 %v1625
        %2320 = vmatprep.mubr.bf16.mxu0 %v982
        %2321 = vmatmul.mubr.bf16.gmra.mrb[0].mxu0 %v981
        %v2322 = vpop.f32.mrb[0].mxu0
        %v2323 = vadd.f32 %v2282, %v2322
        %v2324 = vpop.f32.mrb[0].mxu0
        %v2325 = vadd.f32 %v2284, %v2324
        %v2326 = vpop.f32.mrb[0].mxu0
        %v2327 = vpop.f32.mrb[0].mxu0
        %2328 = vdwg.mxu0
        %2329 = vmatprep.subr.bf16.mxu0 %v1630
        %2330 = vmatpush1.bf16.msra.mxu0 %v1629
        %2331 = vmatprep.subr.bf16.mxu0 %v1634
        %2332 = vmatpush1.bf16.msra.mxu0 %v1633
        %2333 = vmatprep.subr.bf16.mxu0 %v1638
        %2334 = vmatpush1.bf16.msra.mxu0 %v1637
        %2335 = vmatprep.subr.bf16.mxu0 %v1642
        %2336 = vmatpush1.bf16.msra.mxu0 %v1641
        %2337 = vmatprep.subr.bf16.mxu0 %v1646
        %2338 = vmatpush1.bf16.msra.mxu0 %v1645
        %2339 = vmatprep.subr.bf16.mxu0 %v1650
        %2340 = vmatpush1.bf16.msra.mxu0 %v1649
        %2341 = vmatprep.subr.bf16.mxu0 %v1654
        %2342 = vmatpush1.bf16.msra.mxu0 %v1653
        %2343 = vmatprep.subr.bf16.mxu0 %v1658
        %2344 = vmatpush1.bf16.msra.mxu0 %v1657
        %2345 = vmatprep.subr.bf16.mxu0 %v1662
        %2346 = vmatpush1.bf16.msra.mxu0 %v1661
        %2347 = vmatprep.subr.bf16.mxu0 %v1666
        %2348 = vmatpush1.bf16.msra.mxu0 %v1665
        %2349 = vmatprep.subr.bf16.mxu0 %v1670
        %2350 = vmatpush1.bf16.msra.mxu0 %v1669
        %2351 = vmatprep.subr.bf16.mxu0 %v1674
        %2352 = vmatpush1.bf16.msra.mxu0 %v1673
        %2353 = vmatprep.subr.bf16.mxu0 %v1678
        %2354 = vmatpush1.bf16.msra.mxu0 %v1677
        %2355 = vmatprep.subr.bf16.mxu0 %v1682
        %2356 = vmatpush1.bf16.msra.mxu0 %v1681
        %2357 = vmatprep.subr.bf16.mxu0 %v1686
        %2358 = vmatpush1.bf16.msra.mxu0 %v1685
        %2359 = vmatprep.subr.bf16.mxu0 %v1690
        %2360 = vmatpush1.bf16.msra.mxu0 %v1689
        %2361 = vmatprep.mubr.bf16.mxu0 %v984
        %2362 = vmatmul.mubr.bf16.gmra.mrb[0].mxu0 %v983
        %v2363 = vpop.f32.mrb[0].mxu0
        %v2364 = vadd.f32 %v2323, %v2363
        %v2365 = vpop.f32.mrb[0].mxu0
        %v2366 = vadd.f32 %v2325, %v2365
        %v2367 = vpop.f32.mrb[0].mxu0
        %v2368 = vpop.f32.mrb[0].mxu0
        %2369 = vdwg.mxu0
        %2370 = vmatprep.subr.bf16.mxu0 %v1694
        %2371 = vmatpush1.bf16.msra.mxu0 %v1693
        %2372 = vmatprep.subr.bf16.mxu0 %v1698
        %2373 = vmatpush1.bf16.msra.mxu0 %v1697
        %2374 = vmatprep.subr.bf16.mxu0 %v1702
        %2375 = vmatpush1.bf16.msra.mxu0 %v1701
        %2376 = vmatprep.subr.bf16.mxu0 %v1706
        %2377 = vmatpush1.bf16.msra.mxu0 %v1705
        %2378 = vmatprep.subr.bf16.mxu0 %v1710
        %2379 = vmatpush1.bf16.msra.mxu0 %v1709
        %2380 = vmatprep.subr.bf16.mxu0 %v1714
        %2381 = vmatpush1.bf16.msra.mxu0 %v1713
        %2382 = vmatprep.subr.bf16.mxu0 %v1718
        %2383 = vmatpush1.bf16.msra.mxu0 %v1717
        %2384 = vmatprep.subr.bf16.mxu0 %v1722
        %2385 = vmatpush1.bf16.msra.mxu0 %v1721
        %2386 = vmatprep.subr.bf16.mxu0 %v1726
        %2387 = vmatpush1.bf16.msra.mxu0 %v1725
        %2388 = vmatprep.subr.bf16.mxu0 %v1730
        %2389 = vmatpush1.bf16.msra.mxu0 %v1729
        %2390 = vmatprep.subr.bf16.mxu0 %v1734
        %2391 = vmatpush1.bf16.msra.mxu0 %v1733
        %2392 = vmatprep.subr.bf16.mxu0 %v1738
        %2393 = vmatpush1.bf16.msra.mxu0 %v1737
        %2394 = vmatprep.subr.bf16.mxu0 %v1742
        %2395 = vmatpush1.bf16.msra.mxu0 %v1741
        %2396 = vmatprep.subr.bf16.mxu0 %v1746
        %2397 = vmatpush1.bf16.msra.mxu0 %v1745
        %2398 = vmatprep.subr.bf16.mxu0 %v1750
        %2399 = vmatpush1.bf16.msra.mxu0 %v1749
        %2400 = vmatprep.subr.bf16.mxu0 %v1754
        %2401 = vmatpush1.bf16.msra.mxu0 %v1753
        %2402 = vmatprep.mubr.bf16.mxu0 %v986
        %2403 = vmatmul.mubr.bf16.gmra.mrb[0].mxu0 %v985
        %v2404 = vpop.f32.mrb[0].mxu0
        %v2405 = vadd.f32 %v2364, %v2404
        %v2406 = vpop.f32.mrb[0].mxu0
        %v2407 = vadd.f32 %v2366, %v2406
        %v2408 = vpop.f32.mrb[0].mxu0
        %v2409 = vpop.f32.mrb[0].mxu0
        %2410 = vdwg.mxu0
        %v2411 = vld [vmem:[%s362] sm:$0xf]
        %v2413 = vlaneseq
        %v2414 = vshrl.u32 %v2413, 7
        %v2415 = vsub.s32 0, %v2414
        %v2416 = vrot.slane %v2411, %v2415
        %v2417 = vlaneseq
        %v2418 = vshrl.u32 %v2417, 7
        %v2419 = vsub.s32 1, %v2418
        %v2420 = vrot.slane %v2411, %v2419
        %v2421 = vlaneseq
        %v2422 = vshrl.u32 %v2421, 7
        %v2423 = vsub.s32 2, %v2422
        %v2424 = vrot.slane %v2411, %v2423
        %v2425 = vlaneseq
        %v2426 = vshrl.u32 %v2425, 7
        %v2427 = vsub.s32 3, %v2426
        %v2428 = vrot.slane %v2411, %v2427
        %v2433 = vmul.f32 %v2077, %v2416
        %v2434 = vmul.f32 %v2079, %v2420
        %v2435 = vmul.f32 %v2405, %v2424
        %v2436 = vmul.f32 %v2407, %v2428
        %v2437 = vld [vmem:[%s371] sm:$0xf]
        %v2439 = vlaneseq
        %v2440 = vshrl.u32 %v2439, 7
        %v2441 = vsub.s32 0, %v2440
        %v2442 = vrot.slane %v2437, %v2441
        %v2443 = vlaneseq
        %v2444 = vshrl.u32 %v2443, 7
        %v2445 = vsub.s32 1, %v2444
        %v2446 = vrot.slane %v2437, %v2445
        %v2447 = vlaneseq
        %v2448 = vshrl.u32 %v2447, 7
        %v2449 = vsub.s32 2, %v2448
        %v2450 = vrot.slane %v2437, %v2449
        %v2451 = vlaneseq
        %v2452 = vshrl.u32 %v2451, 7
        %v2453 = vsub.s32 3, %v2452
        %v2454 = vrot.slane %v2437, %v2453
        %v2459 = vadd.f32 %v2433, %v2442
        %v2460 = vadd.f32 %v2434, %v2446
        %v2461 = vadd.f32 %v2435, %v2450
        %v2462 = vadd.f32 %v2436, %v2454
        %v2463 = vmax.f32 %v2459, 0.0
        %v2464 = vmax.f32 %v2460, 0.0
        %v2465 = vmax.f32 %v2461, 0.0
        %v2466 = vmax.f32 %v2462, 0.0
        %v2467 = vld [vmem:[%s380] sm:$0xf]
        %v2468 = vld [vmem:[%s380 + $0x4] sm:$0xf]
        %v2469 = vld [vmem:[%s380 + $0x8] sm:$0xf]
        %v2470 = vld [vmem:[%s380 + $0xc] sm:$0xf]
        %v2471 = vld [vmem:[%s380 + $0x10] sm:$0xf]
        %v2472 = vld [vmem:[%s380 + $0x14] sm:$0xf]
        %v2473 = vld [vmem:[%s380 + $0x18] sm:$0xf]
        %v2474 = vld [vmem:[%s380 + $0x1c] sm:$0xf]
        %v2475 = vld [vmem:[%s380 + $0x20] sm:$0xf]
        %v2476 = vld [vmem:[%s380 + $0x24] sm:$0xf]
        %v2477 = vld [vmem:[%s380 + $0x28] sm:$0xf]
        %v2478 = vld [vmem:[%s380 + $0x2c] sm:$0xf]
        %v2479 = vld [vmem:[%s380 + $0x30] sm:$0xf]
        %v2480 = vld [vmem:[%s380 + $0x34] sm:$0xf]
        %v2481 = vld [vmem:[%s380 + $0x38] sm:$0xf]
        %v2482 = vld [vmem:[%s380 + $0x3c] sm:$0xf]
        %v2483 = vld [vmem:[%s380 + $0x40] sm:$0xf]
        %v2484 = vld [vmem:[%s380 + $0x44] sm:$0xf]
        %v2485 = vld [vmem:[%s380 + $0x48] sm:$0xf]
        %v2486 = vld [vmem:[%s380 + $0x4c] sm:$0xf]
        %v2487 = vld [vmem:[%s380 + $0x50] sm:$0xf]
        %v2488 = vld [vmem:[%s380 + $0x54] sm:$0xf]
        %v2489 = vld [vmem:[%s380 + $0x58] sm:$0xf]
        %v2490 = vld [vmem:[%s380 + $0x5c] sm:$0xf]
        %v2491 = vld [vmem:[%s380 + $0x60] sm:$0xf]
        %v2492 = vld [vmem:[%s380 + $0x64] sm:$0xf]
        %v2493 = vld [vmem:[%s380 + $0x68] sm:$0xf]
        %v2494 = vld [vmem:[%s380 + $0x6c] sm:$0xf]
        %v2495 = vld [vmem:[%s380 + $0x70] sm:$0xf]
        %v2496 = vld [vmem:[%s380 + $0x74] sm:$0xf]
        %v2497 = vld [vmem:[%s380 + $0x78] sm:$0xf]
        %v2498 = vld [vmem:[%s380 + $0x7c] sm:$0xf]
        %v2499 = vld [vmem:[%s380 + $0x80] sm:$0xf]
        %v2500 = vld [vmem:[%s380 + $0x84] sm:$0xf]
        %v2501 = vld [vmem:[%s380 + $0x88] sm:$0xf]
        %v2502 = vld [vmem:[%s380 + $0x8c] sm:$0xf]
        %v2503 = vld [vmem:[%s380 + $0x90] sm:$0xf]
        %v2504 = vld [vmem:[%s380 + $0x94] sm:$0xf]
        %v2505 = vld [vmem:[%s380 + $0x98] sm:$0xf]
        %v2506 = vld [vmem:[%s380 + $0x9c] sm:$0xf]
        %v2507 = vld [vmem:[%s380 + $0xa0] sm:$0xf]
        %v2508 = vld [vmem:[%s380 + $0xa4] sm:$0xf]
        %v2509 = vld [vmem:[%s380 + $0xa8] sm:$0xf]
        %v2510 = vld [vmem:[%s380 + $0xac] sm:$0xf]
        %v2511 = vld [vmem:[%s380 + $0xb0] sm:$0xf]
        %v2512 = vld [vmem:[%s380 + $0xb4] sm:$0xf]
        %v2513 = vld [vmem:[%s380 + $0xb8] sm:$0xf]
        %v2514 = vld [vmem:[%s380 + $0xbc] sm:$0xf]
        %v2515 = vld [vmem:[%s380 + $0xc0] sm:$0xf]
        %v2516 = vld [vmem:[%s380 + $0xc4] sm:$0xf]
        %v2517 = vld [vmem:[%s380 + $0xc8] sm:$0xf]
        %v2518 = vld [vmem:[%s380 + $0xcc] sm:$0xf]
        %v2519 = vld [vmem:[%s380 + $0xd0] sm:$0xf]
        %v2520 = vld [vmem:[%s380 + $0xd4] sm:$0xf]
        %v2521 = vld [vmem:[%s380 + $0xd8] sm:$0xf]
        %v2522 = vld [vmem:[%s380 + $0xdc] sm:$0xf]
        %v2523 = vld [vmem:[%s380 + $0xe0] sm:$0xf]
        %v2524 = vld [vmem:[%s380 + $0xe4] sm:$0xf]
        %v2525 = vld [vmem:[%s380 + $0xe8] sm:$0xf]
        %v2526 = vld [vmem:[%s380 + $0xec] sm:$0xf]
        %v2527 = vld [vmem:[%s380 + $0xf0] sm:$0xf]
        %v2528 = vld [vmem:[%s380 + $0xf4] sm:$0xf]
        %v2529 = vld [vmem:[%s380 + $0xf8] sm:$0xf]
        %v2530 = vld [vmem:[%s380 + $0xfc] sm:$0xf]
        %v2531 = vunpack.c.l.bf16 %v2467
        %v2532 = vunpack.c.l.bf16 %v2468
        %v2533 = vunpack.c.l.bf16 %v2469
        %v2534 = vunpack.c.l.bf16 %v2470
        %v2535 = vunpack.c.l.bf16 %v2471
        %v2536 = vunpack.c.l.bf16 %v2472
        %v2537 = vunpack.c.l.bf16 %v2473
        %v2538 = vunpack.c.l.bf16 %v2474
        %v2539 = vunpack.c.l.bf16 %v2475
        %v2540 = vunpack.c.l.bf16 %v2476
        %v2541 = vunpack.c.l.bf16 %v2477
        %v2542 = vunpack.c.l.bf16 %v2478
        %v2543 = vunpack.c.l.bf16 %v2479
        %v2544 = vunpack.c.l.bf16 %v2480
        %v2545 = vunpack.c.l.bf16 %v2481
        %v2546 = vunpack.c.l.bf16 %v2482
        %v2547 = vunpack.c.l.bf16 %v2483
        %v2548 = vunpack.c.l.bf16 %v2484
        %v2549 = vunpack.c.l.bf16 %v2485
        %v2550 = vunpack.c.l.bf16 %v2486
        %v2551 = vunpack.c.l.bf16 %v2487
        %v2552 = vunpack.c.l.bf16 %v2488
        %v2553 = vunpack.c.l.bf16 %v2489
        %v2554 = vunpack.c.l.bf16 %v2490
        %v2555 = vunpack.c.l.bf16 %v2491
        %v2556 = vunpack.c.l.bf16 %v2492
        %v2557 = vunpack.c.l.bf16 %v2493
        %v2558 = vunpack.c.l.bf16 %v2494
        %v2559 = vunpack.c.l.bf16 %v2495
        %v2560 = vunpack.c.l.bf16 %v2496
        %v2561 = vunpack.c.l.bf16 %v2497
        %v2562 = vunpack.c.l.bf16 %v2498
        %v2563 = vunpack.c.l.bf16 %v2499
        %v2564 = vunpack.c.l.bf16 %v2500
        %v2565 = vunpack.c.l.bf16 %v2501
        %v2566 = vunpack.c.l.bf16 %v2502
        %v2567 = vunpack.c.l.bf16 %v2503
        %v2568 = vunpack.c.l.bf16 %v2504
        %v2569 = vunpack.c.l.bf16 %v2505
        %v2570 = vunpack.c.l.bf16 %v2506
        %v2571 = vunpack.c.l.bf16 %v2507
        %v2572 = vunpack.c.l.bf16 %v2508
        %v2573 = vunpack.c.l.bf16 %v2509
        %v2574 = vunpack.c.l.bf16 %v2510
        %v2575 = vunpack.c.l.bf16 %v2511
        %v2576 = vunpack.c.l.bf16 %v2512
        %v2577 = vunpack.c.l.bf16 %v2513
        %v2578 = vunpack.c.l.bf16 %v2514
        %v2579 = vunpack.c.l.bf16 %v2515
        %v2580 = vunpack.c.l.bf16 %v2516
        %v2581 = vunpack.c.l.bf16 %v2517
        %v2582 = vunpack.c.l.bf16 %v2518
        %v2583 = vunpack.c.l.bf16 %v2519
        %v2584 = vunpack.c.l.bf16 %v2520
        %v2585 = vunpack.c.l.bf16 %v2521
        %v2586 = vunpack.c.l.bf16 %v2522
        %v2587 = vunpack.c.l.bf16 %v2523
        %v2588 = vunpack.c.l.bf16 %v2524
        %v2589 = vunpack.c.l.bf16 %v2525
        %v2590 = vunpack.c.l.bf16 %v2526
        %v2591 = vunpack.c.l.bf16 %v2527
        %v2592 = vunpack.c.l.bf16 %v2528
        %v2593 = vunpack.c.l.bf16 %v2529
        %v2594 = vunpack.c.l.bf16 %v2530
        %2595 = vmatprep.subr.mxu0 0.0
        %2596 = vmatpush1.msra.mxu0 %v2531
        %2597 = vmatprep.subr.mxu0 0.0
        %2598 = vmatpush1.msra.mxu0 %v2532
        %2599 = vmatprep.subr.mxu0 0.0
        %2600 = vmatpush1.msra.mxu0 %v2533
        %2601 = vmatprep.subr.mxu0 0.0
        %2602 = vmatpush1.msra.mxu0 %v2534
        %2603 = vmatprep.subr.mxu0 0.0
        %2604 = vmatpush1.msra.mxu0 %v2535
        %2605 = vmatprep.subr.mxu0 0.0
        %2606 = vmatpush1.msra.mxu0 %v2536
        %2607 = vmatprep.subr.mxu0 0.0
        %2608 = vmatpush1.msra.mxu0 %v2537
        %2609 = vmatprep.subr.mxu0 0.0
        %2610 = vmatpush1.msra.mxu0 %v2538
        %2611 = vmatprep.subr.mxu0 0.0
        %2612 = vmatpush1.msra.mxu0 %v2539
        %2613 = vmatprep.subr.mxu0 0.0
        %2614 = vmatpush1.msra.mxu0 %v2540
        %2615 = vmatprep.subr.mxu0 0.0
        %2616 = vmatpush1.msra.mxu0 %v2541
        %2617 = vmatprep.subr.mxu0 0.0
        %2618 = vmatpush1.msra.mxu0 %v2542
        %2619 = vmatprep.subr.mxu0 0.0
        %2620 = vmatpush1.msra.mxu0 %v2543
        %2621 = vmatprep.subr.mxu0 0.0
        %2622 = vmatpush1.msra.mxu0 %v2544
        %2623 = vmatprep.subr.mxu0 0.0
        %2624 = vmatpush1.msra.mxu0 %v2545
        %2625 = vmatprep.subr.mxu0 0.0
        %2626 = vmatpush1.msra.mxu0 %v2546
        %2627 = vmatprep.subr.mxu0 0.0
        %2628 = vmatpush1.msra.mxu0 %v2547
        %2629 = vmatprep.subr.mxu0 0.0
        %2630 = vmatpush1.msra.mxu0 %v2548
        %2631 = vmatprep.subr.mxu0 0.0
        %2632 = vmatpush1.msra.mxu0 %v2549
        %2633 = vmatprep.subr.mxu0 0.0
        %2634 = vmatpush1.msra.mxu0 %v2550
        %2635 = vmatprep.subr.mxu0 0.0
        %2636 = vmatpush1.msra.mxu0 %v2551
        %2637 = vmatprep.subr.mxu0 0.0
        %2638 = vmatpush1.msra.mxu0 %v2552
        %2639 = vmatprep.subr.mxu0 0.0
        %2640 = vmatpush1.msra.mxu0 %v2553
        %2641 = vmatprep.subr.mxu0 0.0
        %2642 = vmatpush1.msra.mxu0 %v2554
        %2643 = vmatprep.subr.mxu0 0.0
        %2644 = vmatpush1.msra.mxu0 %v2555
        %2645 = vmatprep.subr.mxu0 0.0
        %2646 = vmatpush1.msra.mxu0 %v2556
        %2647 = vmatprep.subr.mxu0 0.0
        %2648 = vmatpush1.msra.mxu0 %v2557
        %2649 = vmatprep.subr.mxu0 0.0
        %2650 = vmatpush1.msra.mxu0 %v2558
        %2651 = vmatprep.subr.mxu0 0.0
        %2652 = vmatpush1.msra.mxu0 %v2559
        %2653 = vmatprep.subr.mxu0 0.0
        %2654 = vmatpush1.msra.mxu0 %v2560
        %2655 = vmatprep.subr.mxu0 0.0
        %2656 = vmatpush1.msra.mxu0 %v2561
        %2657 = vmatprep.subr.mxu0 0.0
        %2658 = vmatpush1.msra.mxu0 %v2562
        %2659 = vmatprep.mubr.f32.mxu0 %v2464
        %2660 = vmatmul.mubr.f32.gmra.mrb[0].mxu0 %v2463
        %v2661 = vpop.f32.mrb[0].mxu0
        %v2662 = vadd.f32 0.0, %v2661
        %v2663 = vpop.f32.mrb[0].mxu0
        %2664 = vdwg.mxu0
        %2665 = vmatprep.subr.mxu0 0.0
        %2666 = vmatpush1.msra.mxu0 %v2563
        %2667 = vmatprep.subr.mxu0 0.0
        %2668 = vmatpush1.msra.mxu0 %v2564
        %2669 = vmatprep.subr.mxu0 0.0
        %2670 = vmatpush1.msra.mxu0 %v2565
        %2671 = vmatprep.subr.mxu0 0.0
        %2672 = vmatpush1.msra.mxu0 %v2566
        %2673 = vmatprep.subr.mxu0 0.0
        %2674 = vmatpush1.msra.mxu0 %v2567
        %2675 = vmatprep.subr.mxu0 0.0
        %2676 = vmatpush1.msra.mxu0 %v2568
        %2677 = vmatprep.subr.mxu0 0.0
        %2678 = vmatpush1.msra.mxu0 %v2569
        %2679 = vmatprep.subr.mxu0 0.0
        %2680 = vmatpush1.msra.mxu0 %v2570
        %2681 = vmatprep.subr.mxu0 0.0
        %2682 = vmatpush1.msra.mxu0 %v2571
        %2683 = vmatprep.subr.mxu0 0.0
        %2684 = vmatpush1.msra.mxu0 %v2572
        %2685 = vmatprep.subr.mxu0 0.0
        %2686 = vmatpush1.msra.mxu0 %v2573
        %2687 = vmatprep.subr.mxu0 0.0
        %2688 = vmatpush1.msra.mxu0 %v2574
        %2689 = vmatprep.subr.mxu0 0.0
        %2690 = vmatpush1.msra.mxu0 %v2575
        %2691 = vmatprep.subr.mxu0 0.0
        %2692 = vmatpush1.msra.mxu0 %v2576
        %2693 = vmatprep.subr.mxu0 0.0
        %2694 = vmatpush1.msra.mxu0 %v2577
        %2695 = vmatprep.subr.mxu0 0.0
        %2696 = vmatpush1.msra.mxu0 %v2578
        %2697 = vmatprep.subr.mxu0 0.0
        %2698 = vmatpush1.msra.mxu0 %v2579
        %2699 = vmatprep.subr.mxu0 0.0
        %2700 = vmatpush1.msra.mxu0 %v2580
        %2701 = vmatprep.subr.mxu0 0.0
        %2702 = vmatpush1.msra.mxu0 %v2581
        %2703 = vmatprep.subr.mxu0 0.0
        %2704 = vmatpush1.msra.mxu0 %v2582
        %2705 = vmatprep.subr.mxu0 0.0
        %2706 = vmatpush1.msra.mxu0 %v2583
        %2707 = vmatprep.subr.mxu0 0.0
        %2708 = vmatpush1.msra.mxu0 %v2584
        %2709 = vmatprep.subr.mxu0 0.0
        %2710 = vmatpush1.msra.mxu0 %v2585
        %2711 = vmatprep.subr.mxu0 0.0
        %2712 = vmatpush1.msra.mxu0 %v2586
        %2713 = vmatprep.subr.mxu0 0.0
        %2714 = vmatpush1.msra.mxu0 %v2587
        %2715 = vmatprep.subr.mxu0 0.0
        %2716 = vmatpush1.msra.mxu0 %v2588
        %2717 = vmatprep.subr.mxu0 0.0
        %2718 = vmatpush1.msra.mxu0 %v2589
        %2719 = vmatprep.subr.mxu0 0.0
        %2720 = vmatpush1.msra.mxu0 %v2590
        %2721 = vmatprep.subr.mxu0 0.0
        %2722 = vmatpush1.msra.mxu0 %v2591
        %2723 = vmatprep.subr.mxu0 0.0
        %2724 = vmatpush1.msra.mxu0 %v2592
        %2725 = vmatprep.subr.mxu0 0.0
        %2726 = vmatpush1.msra.mxu0 %v2593
        %2727 = vmatprep.subr.mxu0 0.0
        %2728 = vmatpush1.msra.mxu0 %v2594
        %2729 = vmatprep.mubr.f32.mxu0 %v2466
        %2730 = vmatmul.mubr.f32.gmra.mrb[0].mxu0 %v2465
        %v2731 = vpop.f32.mrb[0].mxu0
        %v2732 = vadd.f32 %v2662, %v2731
        %v2733 = vpop.f32.mrb[0].mxu0
        %2734 = vdwg.mxu0
        %2735 = vst [vmem:[%s432] sm:$0xff] %v2732
        %p2736 = scmp.lt.s32.totalorder %s20, 1
        %s2737 = scalar_select %p2736, %s20, 1
        %s2738 = smul.addr %s2737, 8
        %s2739 = scalar_lea.vmem %s7, %s2738
        // Predicated region
        $region73: #{inception_aux_forward.1} parent=47 // pred_check
          %p2740 = pneg %p205
        $region74: #{inception_aux_forward.1} parent=47 // pred_check_branch
          %2742 = sbr.rel (%p2740) target = $region76
        $region75: #{inception_aux_forward.1} parent=47 // pred_region
          _
        $region76: #{inception_aux_forward.1} parent=47 // pred_fallthru
          _
      $region48: #{inception_aux_forward.1} parent=5 // pred_fallthru
        _
      %p2743 = scmp.le.s32.totalorder 2, %s15
      // Predicated region
      $region77: #{inception_aux_forward.1} parent=5 // pred_check
        %p2744 = pneg %p2743
      $region78: #{inception_aux_forward.1} parent=5 // pred_check_branch
        %2746 = sbr.rel (%p2744) target = $region80
      $region79: #{inception_aux_forward.1} parent=5 // pred_region
        %s2747 = ssub.s32 %s15, 2
        // Predicated region
        $region81: #{inception_aux_forward.1} parent=79 // pred_check
          %p2748 = pneg %p211
        $region82: #{inception_aux_forward.1} parent=79 // pred_check_branch
          %2750 = sbr.rel (%p2748) target = $region84
        $region83: #{inception_aux_forward.1} parent=79 // pred_region
          %p2751 = scmp.lt.s32.totalorder %s21, 1
          %s2752 = scalar_select %p2751, %s21, 1
          %s2753 = smul.addr %s2752, 8
          %s2754 = scalar_lea.vmem %s7, %s2753
        $region84: #{inception_aux_forward.1} parent=79 // pred_fallthru
          _
      $region80: #{inception_aux_forward.1} parent=5 // pred_fallthru
        _
    $region6: #{inception_aux_forward.1} parent=1 // loop_footer
      %s19 = sadd.s32 1, %s15
    $region7: #{inception_aux_forward.1} parent=1 // loop_footer_branch
      %14 = sbr.rel target = $region3
    $region8: #{inception_aux_forward.1} parent=1 // loop_exit
      _
    %2755 = vsyncpa [#allocation3], 1
    %s2756 = scalar_lea.sflag [#allocation3], 1
    %2757 = vsyncpa %s2756, 1
    %2758 = vsyncpa [#allocation5], 1

</llo_original>
